<compile_context>
chip_gen: v6e
topology: v6e:2x2x1
jax: 0.10.0
libtpu: 0.0.40
codegen_flags: <defaults>
</compile_context>

<pallas_src>
import functools

import jax
import jax.numpy as jnp
import numpy as np
from jax.experimental import pallas as pl
from jax.experimental.pallas import tpu as pltpu


def _convlayer_kernel(x2_ref, w1_ref, b1_ref, w2_ref, b2_ref, w3_ref, b3_ref,
                      out_ref, *, use_relu):
    """One batch tile (BT sequences) per grid step.

    x2_ref : (BT, L_out+1, 2*C_in)  pair-folded channels-last input,
             row t = [x[2t, :], x[2t+1, :]]
    wK_ref : (3*C_in_K, C_out_K)    im2col-folded weights (tap-major rows), bf16
    bK_ref : (1, C_out_K)           f32
    out_ref: (BT, L_out, C_out_3)   f32
    """
    bt, l1, c3 = out_ref.shape
    c_in = x2_ref.shape[2] // 2
    c1 = w1_ref.shape[1]
    c2 = w2_ref.shape[1]

    def act(v):
        if use_relu:
            return jnp.maximum(v, 0.0)
        # Tanh funnels through the single EUP slot; it normally hides under
        # MXU/VPU work. Revisit only if a bundle dump shows EUP saturating.
        return jnp.tanh(v)

    def conv_same(h2d, c, w_ref, b_ref):
        """kernel=3 / stride=1 / padding=1 conv + act on (BT*L_out, c) rows."""
        h = h2d.reshape(bt, l1, c)
        z = jnp.zeros((bt, 1, c), jnp.float32)
        hp = jnp.concatenate([z, h, z], axis=1)              # (bt, l1+2, c)
        # im2col: lane order = tap * c + channel, tap 0/1/2 <-> in[t-1+k].
        lhs = jnp.concatenate(
            [hp[:, 0:l1, :], hp[:, 1:l1 + 1, :], hp[:, 2:l1 + 2, :]], axis=-1)
        lhs = lhs.reshape(bt * l1, 3 * c).astype(jnp.bfloat16)
        acc = jnp.dot(lhs, w_ref[...], preferred_element_type=jnp.float32)
        return act(acc + b_ref[...])                         # (bt*l1, c_out) f32

    # ---- conv1: kernel=3, stride=2, padding=0 -------------------------------
    # out1[t] uses x[2t], x[2t+1], x[2t+2]; the pair-folded layout puts
    # [x[2t], x[2t+1]] on row t and x[2t+2] in the first C_in lanes of row t+1,
    # so the full im2col LHS is two unit-stride slices + one lane concat.
    x2 = x2_ref[...]                                         # (bt, l1+1, 2*c_in)
    a01 = x2[:, 0:l1, :]                                     # taps 0, 1
    a2 = x2[:, 1:l1 + 1, 0:c_in]                             # tap 2
    lhs1 = jnp.concatenate([a01, a2], axis=-1)               # (bt, l1, 3*c_in)
    lhs1 = lhs1.reshape(bt * l1, 3 * c_in).astype(jnp.bfloat16)
    h1 = act(jnp.dot(lhs1, w1_ref[...], preferred_element_type=jnp.float32)
             + b1_ref[...])                                  # (bt*l1, c1)

    # ---- conv2 / conv3: kernel=3, stride=1, padding=1 ------------------------
    h2 = conv_same(h1, c1, w2_ref, b2_ref)                   # (bt*l1, c2)
    h3 = conv_same(h2, c2, w3_ref, b3_ref)                   # (bt*l1, c3)

    out_ref[...] = h3.reshape(bt, l1, c3).astype(out_ref.dtype)


def _fold_weight(w):
    """PyTorch (C_out, C_in, 3) -> im2col (3*C_in, C_out), row = tap*C_in + c_in."""
    co, ci, k = w.shape
    return jnp.transpose(w, (2, 1, 0)).reshape(k * ci, co).astype(jnp.bfloat16)


def _pick_batch_tile(B, l1, c_in, c1, c2, c3):
    """Batch-tile size: fill VMEM (v7x-safe budget) but keep >= 2 grid steps."""
    per_elem = 4 * (2 * (l1 + 1) * 2 * c_in        # input block (double-buffered)
                    + 2 * l1 * c3                  # output block (double-buffered)
                    + l1 * (4 * c1 + 4 * c2 + c3)) # in-register intermediates
    budget = 8 * 1024 * 1024                       # well under v7x's 64 MiB VMEM
    bt = max(1, budget // max(per_elem, 1))
    if B >= 2:
        # Keep at least two grid steps so v7x's two TensorCores both get work.
        bt = min(bt, pl.cdiv(B, 2))
    return int(min(bt, B))


def convlayer_forward(x, w1, b1, w2, b2, w3, b3, *, use_relu=True,
                      batch_tile=None):
    """CONVLayer.forward.

    x  : (B, C_in, L)         float32 (PyTorch Conv1d layout)
    wK : (C_out_K, C_in_K, 3) float32 (PyTorch Conv1d weight layout)
    bK : (C_out_K,)           float32
    Returns (B, hidden_size, L_out) with L_out = (L - 3)//2 + 1.
    """
    x = x.astype(jnp.float32)
    B, c_in, L = x.shape
    assert L >= 3, f"CONVLayer needs L >= 3 (kernel=3, padding=0), got L={L}"
    c1, c2, c3 = w1.shape[0], w2.shape[0], w3.shape[0]
    assert w1.shape == (c1, c_in, 3)
    assert w2.shape == (c2, c1, 3)
    assert w3.shape == (c3, c2, 3)
    l1 = (L - 3) // 2 + 1

    # Channels-last + pair-fold for the stride-2 conv:
    #   x2[b, t, :] = [x[b, :, 2t], x[b, :, 2t+1]]  -> shape (B, l1+1, 2*C_in).
    # The reshape is free (contiguous); only the NCL->NLC transpose moves data.
    rows = 2 * l1 + 2
    x_lc = jnp.transpose(x, (0, 2, 1))                       # (B, L, C_in)
    if L >= rows:
        x_lc = x_lc[:, :rows, :]
    else:                                                    # odd L: pad one row
        x_lc = jnp.pad(x_lc, ((0, 0), (0, rows - L), (0, 0)))
    x2 = x_lc.reshape(B, l1 + 1, 2 * c_in)

    # im2col-folded bf16 weights and f32 biases.
    w1f, w2f, w3f = _fold_weight(w1), _fold_weight(w2), _fold_weight(w3)
    b1r = b1.reshape(1, c1).astype(jnp.float32)
    b2r = b2.reshape(1, c2).astype(jnp.float32)
    b3r = b3.reshape(1, c3).astype(jnp.float32)

    bt = batch_tile if batch_tile is not None else _pick_batch_tile(
        B, l1, c_in, c1, c2, c3)
    grid = (pl.cdiv(B, bt),)

    out = pl.pallas_call(
        functools.partial(_convlayer_kernel, use_relu=use_relu),
        out_shape=jax.ShapeDtypeStruct((B, l1, c3), jnp.float32),
        grid_spec=pltpu.PrefetchScalarGridSpec(
            num_scalar_prefetch=0,
            grid=grid,
            in_specs=[
                pl.BlockSpec((bt, l1 + 1, 2 * c_in), lambda i: (i, 0, 0)),  # x2
                pl.BlockSpec((3 * c_in, c1), lambda i: (0, 0)),             # W1
                pl.BlockSpec((1, c1), lambda i: (0, 0)),                    # b1
                pl.BlockSpec((3 * c1, c2), lambda i: (0, 0)),               # W2
                pl.BlockSpec((1, c2), lambda i: (0, 0)),                    # b2
                pl.BlockSpec((3 * c2, c3), lambda i: (0, 0)),               # W3
                pl.BlockSpec((1, c3), lambda i: (0, 0)),                    # b3
            ],
            out_specs=pl.BlockSpec((bt, l1, c3), lambda i: (i, 0, 0)),
        ),
        compiler_params=pltpu.CompilerParams(
            dimension_semantics=("parallel",),   # shards batch tiles across TCs on v7x
            vmem_limit_bytes=32 * 1024 * 1024,   # consistent with the BT budget; v7x-safe
        ),
    )(x2, w1f, b1r, w2f, b2r, w3f, b3r)

    # Back to PyTorch layout (B, C_out, L_out).
    return jnp.transpose(out, (0, 2, 1))


def _convlayer_ref(x, w1, b1, w2, b2, w3, b3, use_relu):
    """Pure-JAX reference using lax.conv_general_dilated (PyTorch semantics)."""
    act = (lambda v: jnp.maximum(v, 0.0)) if use_relu else jnp.tanh
    dn = ("NCH", "OIH", "NCH")
    p = jax.lax.Precision.HIGHEST
    h = jax.lax.conv_general_dilated(x, w1, window_strides=(2,),
                                     padding="VALID", dimension_numbers=dn,
                                     precision=p)
    h = act(h + b1[None, :, None])
    h = jax.lax.conv_general_dilated(h, w2, window_strides=(1,),
                                     padding=[(1, 1)], dimension_numbers=dn,
                                     precision=p)
    h = act(h + b2[None, :, None])
    h = jax.lax.conv_general_dilated(h, w3, window_strides=(1,),
                                     padding=[(1, 1)], dimension_numbers=dn,
                                     precision=p)
    h = act(h + b3[None, :, None])
    return h


if __name__ == "__main__":
    key = jax.random.PRNGKey(0)

    def make_params(k, c_in, hidden):
        c1, c2, c3 = hidden // 4, hidden // 2, hidden
        ks = jax.random.split(k, 6)
        w1 = jax.random.normal(ks[0], (c1, c_in, 3), jnp.float32) * 0.3
        b1 = jax.random.normal(ks[1], (c1,), jnp.float32) * 0.1
        w2 = jax.random.normal(ks[2], (c2, c1, 3), jnp.float32) * 0.3
        b2 = jax.random.normal(ks[3], (c2,), jnp.float32) * 0.1
        w3 = jax.random.normal(ks[4], (c3, c2, 3), jnp.float32) * 0.3
        b3 = jax.random.normal(ks[5], (c3,), jnp.float32) * 0.1
        return w1, b1, w2, b2, w3, b3

    # Two small configs: (even L, ReLU) exercising BT=4 / grid=2, and
    # (odd L, Tanh) exercising the pad branch with BT=3 / grid=2.
    configs = [
        dict(B=8, c_in=4, L=16, hidden=32, use_relu=True),
        dict(B=6, c_in=4, L=17, hidden=32, use_relu=False),
    ]

    for cfg in configs:
        key, kx, kp = jax.random.split(key, 3)
        x = jax.random.normal(kx, (cfg["B"], cfg["c_in"], cfg["L"]),
                              dtype=jnp.float32)
        params = make_params(kp, cfg["c_in"], cfg["hidden"])

        out = convlayer_forward(x, *params, use_relu=cfg["use_relu"])
        out = jax.block_until_ready(out)

        ref = _convlayer_ref(x, *params, cfg["use_relu"])
        l_out = (cfg["L"] - 3) // 2 + 1
        assert out.shape == ref.shape == (cfg["B"], cfg["hidden"], l_out)

        # Matmul operands are bf16 (per perf guidance) with f32 accumulation,
        # so the elementwise tolerance is loose; structural errors (dropped
        # tap, wrong stride/padding, bias mis-broadcast) would be O(0.1-1) and
        # are additionally caught by the tight mean-abs-error check below.
        out_np, ref_np = np.asarray(out), np.asarray(ref)
        np.testing.assert_allclose(out_np, ref_np, rtol=5e-2, atol=5e-2)
        assert float(np.mean(np.abs(out_np - ref_np))) < 1e-2

    print("KERNEL_OK")
</pallas_src>

<mosaic_0001>
module attributes {stable_mosaic.version = 11 : i64} {
  func.func @_convlayer_kernel(%arg0: i32, %arg1: memref<4x8x8xf32, #tpu.memory_space<vmem>>, %arg2: memref<12x8xbf16, #tpu.memory_space<vmem>>, %arg3: memref<1x8xf32, #tpu.memory_space<vmem>>, %arg4: memref<24x16xbf16, #tpu.memory_space<vmem>>, %arg5: memref<1x16xf32, #tpu.memory_space<vmem>>, %arg6: memref<48x32xbf16, #tpu.memory_space<vmem>>, %arg7: memref<1x32xf32, #tpu.memory_space<vmem>>, %arg8: memref<4x7x32xf32, #tpu.memory_space<vmem>>) attributes {dimension_semantics = [#tpu.dimension_semantics<parallel>], iteration_bounds = array<i64: 2>, scalar_prefetch = 0 : i64, scratch_operands = 0 : i64, tpu.core_type = #tpu.core_type<tc>, window_params = [{transform_indices = @transform_0, window_bounds = array<i64: 4, 8, 8>}, {pipeline_mode = #tpu.pipeline_mode<synchronous>, transform_indices = @transform_1, window_bounds = array<i64: 12, 8>}, {pipeline_mode = #tpu.pipeline_mode<synchronous>, transform_indices = @transform_2, window_bounds = array<i64: 1, 8>}, {pipeline_mode = #tpu.pipeline_mode<synchronous>, transform_indices = @transform_3, window_bounds = array<i64: 24, 16>}, {pipeline_mode = #tpu.pipeline_mode<synchronous>, transform_indices = @transform_4, window_bounds = array<i64: 1, 16>}, {pipeline_mode = #tpu.pipeline_mode<synchronous>, transform_indices = @transform_5, window_bounds = array<i64: 48, 32>}, {pipeline_mode = #tpu.pipeline_mode<synchronous>, transform_indices = @transform_6, window_bounds = array<i64: 1, 32>}, {transform_indices = @transform_7, window_bounds = array<i64: 4, 7, 32>}]} {
    %c0 = arith.constant 0 : index
    %c0_0 = arith.constant 0 : index
    %c0_1 = arith.constant 0 : index
    %0 = vector.load %arg1[%c0, %c0_0, %c0_1] : memref<4x8x8xf32, #tpu.memory_space<vmem>>, vector<4x8x8xf32>
    %1 = vector.extract_strided_slice %0 {offsets = [0, 0, 0], sizes = [4, 7, 8], strides = [1, 1, 1]} : vector<4x8x8xf32> to vector<4x7x8xf32>
    %2 = vector.extract_strided_slice %0 {offsets = [0, 1, 0], sizes = [4, 7, 4], strides = [1, 1, 1]} : vector<4x8x8xf32> to vector<4x7x4xf32>
    %3 = tpu.concatenate %1, %2 in 2 : vector<4x7x8xf32>, vector<4x7x4xf32> -> vector<4x7x12xf32>
    %4 = vector.shape_cast %3 : vector<4x7x12xf32> to vector<28x12xf32>
    %5 = arith.truncf %4 : vector<28x12xf32> to vector<28x12xbf16>
    %c0_2 = arith.constant 0 : index
    %c0_3 = arith.constant 0 : index
    %6 = vector.load %arg2[%c0_2, %c0_3] : memref<12x8xbf16, #tpu.memory_space<vmem>>, vector<12x8xbf16>
    %cst = arith.constant dense<0.000000e+00> : vector<28x8xf32>
    %7 = tpu.matmul %5, %6, %cst {dimension_numbers = #tpu.dot_dimension_numbers<[1], [0], [0], [1], [0, 0, 1, 1], [], []>} : vector<28x12xbf16>, vector<12x8xbf16>, vector<28x8xf32> -> vector<28x8xf32>
    %c0_4 = arith.constant 0 : index
    %c0_5 = arith.constant 0 : index
    %8 = vector.load %arg3[%c0_4, %c0_5] : memref<1x8xf32, #tpu.memory_space<vmem>>, vector<1x8xf32>
    %9 = vector.broadcast %8 : vector<1x8xf32> to vector<28x8xf32>
    %10 = arith.addf %7, %9 : vector<28x8xf32>
    %cst_6 = arith.constant 0.000000e+00 : f32
    %11 = vector.broadcast %cst_6 : f32 to vector<28x8xf32>
    %12 = arith.maximumf %10, %11 : vector<28x8xf32>
    %13 = vector.shape_cast %12 : vector<28x8xf32> to vector<4x7x8xf32>
    %cst_7 = arith.constant 0.000000e+00 : f32
    %14 = vector.broadcast %cst_7 : f32 to vector<4x1x8xf32>
    %15 = tpu.concatenate %14, %13, %14 in 1 : vector<4x1x8xf32>, vector<4x7x8xf32>, vector<4x1x8xf32> -> vector<4x9x8xf32>
    %16 = vector.extract_strided_slice %15 {offsets = [0, 0, 0], sizes = [4, 7, 8], strides = [1, 1, 1]} : vector<4x9x8xf32> to vector<4x7x8xf32>
    %17 = vector.extract_strided_slice %15 {offsets = [0, 1, 0], sizes = [4, 7, 8], strides = [1, 1, 1]} : vector<4x9x8xf32> to vector<4x7x8xf32>
    %18 = vector.extract_strided_slice %15 {offsets = [0, 2, 0], sizes = [4, 7, 8], strides = [1, 1, 1]} : vector<4x9x8xf32> to vector<4x7x8xf32>
    %19 = tpu.concatenate %16, %17, %18 in 2 : vector<4x7x8xf32>, vector<4x7x8xf32>, vector<4x7x8xf32> -> vector<4x7x24xf32>
    %20 = vector.shape_cast %19 : vector<4x7x24xf32> to vector<28x24xf32>
    %21 = arith.truncf %20 : vector<28x24xf32> to vector<28x24xbf16>
    %c0_8 = arith.constant 0 : index
    %c0_9 = arith.constant 0 : index
    %22 = vector.load %arg4[%c0_8, %c0_9] : memref<24x16xbf16, #tpu.memory_space<vmem>>, vector<24x16xbf16>
    %cst_10 = arith.constant dense<0.000000e+00> : vector<28x16xf32>
    %23 = tpu.matmul %21, %22, %cst_10 {dimension_numbers = #tpu.dot_dimension_numbers<[1], [0], [0], [1], [0, 0, 1, 1], [], []>} : vector<28x24xbf16>, vector<24x16xbf16>, vector<28x16xf32> -> vector<28x16xf32>
    %c0_11 = arith.constant 0 : index
    %c0_12 = arith.constant 0 : index
    %24 = vector.load %arg5[%c0_11, %c0_12] : memref<1x16xf32, #tpu.memory_space<vmem>>, vector<1x16xf32>
    %25 = vector.broadcast %24 : vector<1x16xf32> to vector<28x16xf32>
    %26 = arith.addf %23, %25 : vector<28x16xf32>
    %cst_13 = arith.constant 0.000000e+00 : f32
    %27 = vector.broadcast %cst_13 : f32 to vector<28x16xf32>
    %28 = arith.maximumf %26, %27 : vector<28x16xf32>
    %29 = vector.shape_cast %28 : vector<28x16xf32> to vector<4x7x16xf32>
    %cst_14 = arith.constant 0.000000e+00 : f32
    %30 = vector.broadcast %cst_14 : f32 to vector<4x1x16xf32>
    %31 = tpu.concatenate %30, %29, %30 in 1 : vector<4x1x16xf32>, vector<4x7x16xf32>, vector<4x1x16xf32> -> vector<4x9x16xf32>
    %32 = vector.extract_strided_slice %31 {offsets = [0, 0, 0], sizes = [4, 7, 16], strides = [1, 1, 1]} : vector<4x9x16xf32> to vector<4x7x16xf32>
    %33 = vector.extract_strided_slice %31 {offsets = [0, 1, 0], sizes = [4, 7, 16], strides = [1, 1, 1]} : vector<4x9x16xf32> to vector<4x7x16xf32>
    %34 = vector.extract_strided_slice %31 {offsets = [0, 2, 0], sizes = [4, 7, 16], strides = [1, 1, 1]} : vector<4x9x16xf32> to vector<4x7x16xf32>
    %35 = tpu.concatenate %32, %33, %34 in 2 : vector<4x7x16xf32>, vector<4x7x16xf32>, vector<4x7x16xf32> -> vector<4x7x48xf32>
    %36 = vector.shape_cast %35 : vector<4x7x48xf32> to vector<28x48xf32>
    %37 = arith.truncf %36 : vector<28x48xf32> to vector<28x48xbf16>
    %c0_15 = arith.constant 0 : index
    %c0_16 = arith.constant 0 : index
    %38 = vector.load %arg6[%c0_15, %c0_16] : memref<48x32xbf16, #tpu.memory_space<vmem>>, vector<48x32xbf16>
    %cst_17 = arith.constant dense<0.000000e+00> : vector<28x32xf32>
    %39 = tpu.matmul %37, %38, %cst_17 {dimension_numbers = #tpu.dot_dimension_numbers<[1], [0], [0], [1], [0, 0, 1, 1], [], []>} : vector<28x48xbf16>, vector<48x32xbf16>, vector<28x32xf32> -> vector<28x32xf32>
    %c0_18 = arith.constant 0 : index
    %c0_19 = arith.constant 0 : index
    %40 = vector.load %arg7[%c0_18, %c0_19] : memref<1x32xf32, #tpu.memory_space<vmem>>, vector<1x32xf32>
    %41 = vector.broadcast %40 : vector<1x32xf32> to vector<28x32xf32>
    %42 = arith.addf %39, %41 : vector<28x32xf32>
    %cst_20 = arith.constant 0.000000e+00 : f32
    %43 = vector.broadcast %cst_20 : f32 to vector<28x32xf32>
    %44 = arith.maximumf %42, %43 : vector<28x32xf32>
    %45 = vector.shape_cast %44 : vector<28x32xf32> to vector<4x7x32xf32>
    %c0_21 = arith.constant 0 : index
    %c0_22 = arith.constant 0 : index
    %c0_23 = arith.constant 0 : index
    %46 = vector.load %arg8[%c0_21, %c0_22, %c0_23] : memref<4x7x32xf32, #tpu.memory_space<vmem>>, vector<4x7x32xf32>
    tpu.vector_store %arg8[%c0_21, %c0_22, %c0_23], %45 {strides = array<i32>} : memref<4x7x32xf32, #tpu.memory_space<vmem>>, vector<4x7x32xf32>,
    return
  }
  func.func @transform_0(%arg0: i32) -> (i32, i32, i32) {
    %c0_i32 = arith.constant 0 : i32
    %c0_i32_0 = arith.constant 0 : i32
    %c0_i32_1 = arith.constant 0 : i32
    return %arg0, %c0_i32, %c0_i32_0 : i32, i32, i32
  }
  func.func @transform_1(%arg0: i32) -> (i32, i32) {
    %c0_i32 = arith.constant 0 : i32
    %c0_i32_0 = arith.constant 0 : i32
    %c0_i32_1 = arith.constant 0 : i32
    return %c0_i32, %c0_i32_0 : i32, i32
  }
  func.func @transform_2(%arg0: i32) -> (i32, i32) {
    %c0_i32 = arith.constant 0 : i32
    %c0_i32_0 = arith.constant 0 : i32
    %c0_i32_1 = arith.constant 0 : i32
    return %c0_i32, %c0_i32_0 : i32, i32
  }
  func.func @transform_3(%arg0: i32) -> (i32, i32) {
    %c0_i32 = arith.constant 0 : i32
    %c0_i32_0 = arith.constant 0 : i32
    %c0_i32_1 = arith.constant 0 : i32
    return %c0_i32, %c0_i32_0 : i32, i32
  }
  func.func @transform_4(%arg0: i32) -> (i32, i32) {
    %c0_i32 = arith.constant 0 : i32
    %c0_i32_0 = arith.constant 0 : i32
    %c0_i32_1 = arith.constant 0 : i32
    return %c0_i32, %c0_i32_0 : i32, i32
  }
  func.func @transform_5(%arg0: i32) -> (i32, i32) {
    %c0_i32 = arith.constant 0 : i32
    %c0_i32_0 = arith.constant 0 : i32
    %c0_i32_1 = arith.constant 0 : i32
    return %c0_i32, %c0_i32_0 : i32, i32
  }
  func.func @transform_6(%arg0: i32) -> (i32, i32) {
    %c0_i32 = arith.constant 0 : i32
    %c0_i32_0 = arith.constant 0 : i32
    %c0_i32_1 = arith.constant 0 : i32
    return %c0_i32, %c0_i32_0 : i32, i32
  }
  func.func @transform_7(%arg0: i32) -> (i32, i32, i32) {
    %c0_i32 = arith.constant 0 : i32
    %c0_i32_0 = arith.constant 0 : i32
    %c0_i32_1 = arith.constant 0 : i32
    return %arg0, %c0_i32, %c0_i32_0 : i32, i32, i32
  }
}

</mosaic_0001>

<llo_original>
// kernel: tpu_custom_call.1
$region0: #{tpu_custom_call.1}
  #allocation0 [shape = 'u32[]', space=smem, size = 0x4, offset = 0x4, fixed_abs, tag = 'smem constant byte address 0x4 - core index']
  #allocation1 [shape = 'u32[144,128]{1,0:T(1,128)}', space=vmem, size = 0x12000, scoped, tag = 'internal scratch']
  %s0 = inlined_call_operand.vmem [shape: f32[8,8,8], index: 0, kind: input, shape index: {}]
  %s1 = inlined_call_operand.vmem [shape: bf16[12,8], index: 1, kind: input, shape index: {}]
  %s2 = inlined_call_operand.vmem [shape: f32[1,8], index: 2, kind: input, shape index: {}]
  %s3 = inlined_call_operand.vmem [shape: bf16[24,16], index: 3, kind: input, shape index: {}]
  %s4 = inlined_call_operand.hbm [shape: f32[1,16], index: 4, kind: input, shape index: {}]
  %s5 = inlined_call_operand.vmem [shape: bf16[48,32], index: 5, kind: input, shape index: {}]
  %s6 = inlined_call_operand.vmem [shape: f32[1,32], index: 6, kind: input, shape index: {}]
  %s7 = inlined_call_operand.vmem [shape: f32[8,7,32], index: 7, kind: output, shape index: {}]
  %s8 = sld [smem:[#allocation0]]
  $region65: #{tpu_custom_call.1} parent=0
    _
  %s10 = ssub.s32 1, %s8
  %s11 = scalar_select 0, %s10, %s8
  $region1: #{tpu_custom_call.1} parent=0
    #allocation2 [shape = 'u8[512]{0}', space=vmem, size = 0x400, scoped, tag = 'input window, operand 4, single buffered']
    #allocation3 [shape = 's32[2]{0}', space=sflag, size = 0x8, scoped, tag = 'scoped memory for tpu_custom_call.1']
    %12 = vsyncpa [#allocation3], 0
    loop: start=0, step=1, limit=4
    $region2: #{tpu_custom_call.1} parent=1 // loop_pre_header
      _
    $region3: #{tpu_custom_call.1} parent=1 // loop_header
      %s14 = sphi 0, %s18
      %p15 = scmp.ge.s32.totalorder %s14, 4
      %s24 = sphi 0, %s26
      %s27 = sphi 0, %s24
      %s28 = sphi 0, %s27
      %s44 = sphi 0, %s28
      %s48 = sphi 0, %s48
      %s50 = sphi 0, %s48
      %s51 = sphi 0, %s50
      %s65 = sphi 0, %s51
      %s69 = sphi 0, %s69
      %s71 = sphi 0, %s69
      %s72 = sphi 0, %s71
      %s86 = sphi 0, %s72
      %s90 = sphi 0, %s90
      %s92 = sphi 0, %s90
      %s93 = sphi 0, %s92
      %s107 = sphi 0, %s93
      %s111 = sphi 0, %s111
      %s113 = sphi 0, %s111
      %s114 = sphi 0, %s113
      %s128 = sphi 0, %s114
      %s132 = sphi 0, %s132
      %s134 = sphi 0, %s132
      %s135 = sphi 0, %s134
      %s149 = sphi 0, %s135
      %s153 = sphi 0, %s153
      %s155 = sphi 0, %s153
      %s156 = sphi 0, %s155
      %s170 = sphi 0, %s156
      %s176 = sphi 0, %s178
      %s179 = sphi 0, %s176
      %s180 = sphi 0, %s179
      %s196 = sphi 0, %s180
    $region4: #{tpu_custom_call.1} parent=1 // loop_header_branch
      %17 = sbr.rel (%p15) target = $region8
    $region5: #{tpu_custom_call.1} parent=1 // loop_body
      %s19 = ssub.s32 %s14, 1
      %s20 = ssub.s32 %s14, 2
      %s21 = sadd.s32 %s14, 1
      %s22 = ssub.s32 %s14, %s21
      %p23 = scmp.eq.s32.totalorder %s22, 0
      %s25 = sadd.s32 %s24, 1
      %s26 = scalar_select %p23, %s24, %s25
      %p29 = pneg %p23
      %p30 = scmp.eq.s32.totalorder %s14, 1
      %p31 = por %p29, %p30
      %p32 = scmp.ne.s32.totalorder %s24, %s27
      %p33 = scmp.eq.s32.totalorder %s14, 0
      %p34 = por %p32, %p33
      %p35 = scmp.ne.s32.totalorder %s24, %s27
      %p36 = scmp.eq.s32.totalorder %s19, 1
      %p37 = por %p35, %p36
      %p38 = scmp.ne.s32.totalorder %s27, %s28
      %p39 = scmp.eq.s32.totalorder %s19, 0
      %p40 = por %p38, %p39
      %p41 = scmp.ne.s32.totalorder %s27, %s28
      %p42 = scmp.eq.s32.totalorder %s20, 1
      %p43 = por %p41, %p42
      %p45 = scmp.ne.s32.totalorder %s28, %s44
      %p46 = scmp.eq.s32.totalorder %s20, 0
      %p47 = por %p45, %p46
      %s49 = sadd.s32 %s48, 1
      %p52 = scmp.eq.s32.totalorder %s14, 1
      %p53 = scmp.ne.s32.totalorder %s48, %s50
      %p54 = scmp.eq.s32.totalorder %s14, 0
      %p55 = por %p53, %p54
      %p56 = scmp.ne.s32.totalorder %s48, %s50
      %p57 = scmp.eq.s32.totalorder %s19, 1
      %p58 = por %p56, %p57
      %p59 = scmp.ne.s32.totalorder %s50, %s51
      %p60 = scmp.eq.s32.totalorder %s19, 0
      %p61 = por %p59, %p60
      %p62 = scmp.ne.s32.totalorder %s50, %s51
      %p63 = scmp.eq.s32.totalorder %s20, 1
      %p64 = por %p62, %p63
      %p66 = scmp.ne.s32.totalorder %s51, %s65
      %p67 = scmp.eq.s32.totalorder %s20, 0
      %p68 = por %p66, %p67
      %s70 = sadd.s32 %s69, 1
      %p73 = scmp.eq.s32.totalorder %s14, 1
      %p74 = scmp.ne.s32.totalorder %s69, %s71
      %p75 = scmp.eq.s32.totalorder %s14, 0
      %p76 = por %p74, %p75
      %p77 = scmp.ne.s32.totalorder %s69, %s71
      %p78 = scmp.eq.s32.totalorder %s19, 1
      %p79 = por %p77, %p78
      %p80 = scmp.ne.s32.totalorder %s71, %s72
      %p81 = scmp.eq.s32.totalorder %s19, 0
      %p82 = por %p80, %p81
      %p83 = scmp.ne.s32.totalorder %s71, %s72
      %p84 = scmp.eq.s32.totalorder %s20, 1
      %p85 = por %p83, %p84
      %p87 = scmp.ne.s32.totalorder %s72, %s86
      %p88 = scmp.eq.s32.totalorder %s20, 0
      %p89 = por %p87, %p88
      %s91 = sadd.s32 %s90, 1
      %p94 = scmp.eq.s32.totalorder %s14, 1
      %p95 = scmp.ne.s32.totalorder %s90, %s92
      %p96 = scmp.eq.s32.totalorder %s14, 0
      %p97 = por %p95, %p96
      %p98 = scmp.ne.s32.totalorder %s90, %s92
      %p99 = scmp.eq.s32.totalorder %s19, 1
      %p100 = por %p98, %p99
      %p101 = scmp.ne.s32.totalorder %s92, %s93
      %p102 = scmp.eq.s32.totalorder %s19, 0
      %p103 = por %p101, %p102
      %p104 = scmp.ne.s32.totalorder %s92, %s93
      %p105 = scmp.eq.s32.totalorder %s20, 1
      %p106 = por %p104, %p105
      %p108 = scmp.ne.s32.totalorder %s93, %s107
      %p109 = scmp.eq.s32.totalorder %s20, 0
      %p110 = por %p108, %p109
      %s112 = sadd.s32 %s111, 1
      %p115 = scmp.eq.s32.totalorder %s14, 1
      %p116 = scmp.ne.s32.totalorder %s111, %s113
      %p117 = scmp.eq.s32.totalorder %s14, 0
      %p118 = por %p116, %p117
      %p119 = scmp.ne.s32.totalorder %s111, %s113
      %p120 = scmp.eq.s32.totalorder %s19, 1
      %p121 = por %p119, %p120
      %p122 = scmp.ne.s32.totalorder %s113, %s114
      %p123 = scmp.eq.s32.totalorder %s19, 0
      %p124 = por %p122, %p123
      %p125 = scmp.ne.s32.totalorder %s113, %s114
      %p126 = scmp.eq.s32.totalorder %s20, 1
      %p127 = por %p125, %p126
      %p129 = scmp.ne.s32.totalorder %s114, %s128
      %p130 = scmp.eq.s32.totalorder %s20, 0
      %p131 = por %p129, %p130
      %s133 = sadd.s32 %s132, 1
      %p136 = scmp.eq.s32.totalorder %s14, 1
      %p137 = scmp.ne.s32.totalorder %s132, %s134
      %p138 = scmp.eq.s32.totalorder %s14, 0
      %p139 = por %p137, %p138
      %p140 = scmp.ne.s32.totalorder %s132, %s134
      %p141 = scmp.eq.s32.totalorder %s19, 1
      %p142 = por %p140, %p141
      %p143 = scmp.ne.s32.totalorder %s134, %s135
      %p144 = scmp.eq.s32.totalorder %s19, 0
      %p145 = por %p143, %p144
      %p146 = scmp.ne.s32.totalorder %s134, %s135
      %p147 = scmp.eq.s32.totalorder %s20, 1
      %p148 = por %p146, %p147
      %p150 = scmp.ne.s32.totalorder %s135, %s149
      %p151 = scmp.eq.s32.totalorder %s20, 0
      %p152 = por %p150, %p151
      %s154 = sadd.s32 %s153, 1
      %p157 = scmp.eq.s32.totalorder %s14, 1
      %p158 = scmp.ne.s32.totalorder %s153, %s155
      %p159 = scmp.eq.s32.totalorder %s14, 0
      %p160 = por %p158, %p159
      %p161 = scmp.ne.s32.totalorder %s153, %s155
      %p162 = scmp.eq.s32.totalorder %s19, 1
      %p163 = por %p161, %p162
      %p164 = scmp.ne.s32.totalorder %s155, %s156
      %p165 = scmp.eq.s32.totalorder %s19, 0
      %p166 = por %p164, %p165
      %p167 = scmp.ne.s32.totalorder %s155, %s156
      %p168 = scmp.eq.s32.totalorder %s20, 1
      %p169 = por %p167, %p168
      %p171 = scmp.ne.s32.totalorder %s156, %s170
      %p172 = scmp.eq.s32.totalorder %s20, 0
      %p173 = por %p171, %p172
      %s174 = ssub.s32 %s14, %s21
      %p175 = scmp.eq.s32.totalorder %s174, 0
      %s177 = sadd.s32 %s176, 1
      %s178 = scalar_select %p175, %s176, %s177
      %p181 = pneg %p175
      %p182 = scmp.eq.s32.totalorder %s14, 1
      %p183 = por %p181, %p182
      %p184 = scmp.ne.s32.totalorder %s176, %s179
      %p185 = scmp.eq.s32.totalorder %s14, 0
      %p186 = por %p184, %p185
      %p187 = scmp.ne.s32.totalorder %s176, %s179
      %p188 = scmp.eq.s32.totalorder %s19, 1
      %p189 = por %p187, %p188
      %p190 = scmp.ne.s32.totalorder %s179, %s180
      %p191 = scmp.eq.s32.totalorder %s19, 0
      %p192 = por %p190, %p191
      %p193 = scmp.ne.s32.totalorder %s179, %s180
      %p194 = scmp.eq.s32.totalorder %s20, 1
      %p195 = por %p193, %p194
      %p197 = scmp.ne.s32.totalorder %s180, %s196
      %p198 = scmp.eq.s32.totalorder %s20, 0
      %p199 = por %p197, %p198
      %p200 = scmp.le.s32.totalorder 1, %s14
      %p201 = scmp.lt.s32.totalorder %s14, 3
      %p202 = pnand %p200, %p201
      %p203 = pneg %p202
      // Predicated region
      $region9: #{tpu_custom_call.1} parent=5 // pred_check
        _
      $region10: #{tpu_custom_call.1} parent=5 // pred_check_branch
        %205 = sbr.rel (%p202) target = $region12
      $region11: #{tpu_custom_call.1} parent=5 // pred_region
        %s206 = ssub.s32 %s14, 1
        // Predicated region
        $region13: #{tpu_custom_call.1} parent=11 // pred_check
          %p207 = pneg %p61
        $region14: #{tpu_custom_call.1} parent=11 // pred_check_branch
          %209 = sbr.rel (%p207) target = $region16
        $region15: #{tpu_custom_call.1} parent=11 // pred_region
          _
        $region16: #{tpu_custom_call.1} parent=11 // pred_fallthru
          _
        // Predicated region
        $region17: #{tpu_custom_call.1} parent=11 // pred_check
          %p210 = pneg %p82
        $region18: #{tpu_custom_call.1} parent=11 // pred_check_branch
          %212 = sbr.rel (%p210) target = $region20
        $region19: #{tpu_custom_call.1} parent=11 // pred_region
          _
        $region20: #{tpu_custom_call.1} parent=11 // pred_fallthru
          _
        // Predicated region
        $region21: #{tpu_custom_call.1} parent=11 // pred_check
          %p213 = pneg %p103
        $region22: #{tpu_custom_call.1} parent=11 // pred_check_branch
          %215 = sbr.rel (%p213) target = $region24
        $region23: #{tpu_custom_call.1} parent=11 // pred_region
          _
        $region24: #{tpu_custom_call.1} parent=11 // pred_fallthru
          _
        // Predicated region
        $region25: #{tpu_custom_call.1} parent=11 // pred_check
          %p216 = pneg %p124
        $region26: #{tpu_custom_call.1} parent=11 // pred_check_branch
          %218 = sbr.rel (%p216) target = $region28
        $region27: #{tpu_custom_call.1} parent=11 // pred_region
          %s220 = ssub.s32 16, 16
          %221 = vsyncadd [#allocation3], %s220
          %s223 = sshll.u32 [#allocation2], 4
          %s224 = int_to_ptr.vmem [resolvable:$true] %s223
          %226 = dma.hbm_to_vmem [thread:$0]  %s4, 16, %s224, [#allocation3]
        $region28: #{tpu_custom_call.1} parent=11 // pred_fallthru
          _
        // Predicated region
        $region29: #{tpu_custom_call.1} parent=11 // pred_check
          %p227 = pneg %p145
        $region30: #{tpu_custom_call.1} parent=11 // pred_check_branch
          %229 = sbr.rel (%p227) target = $region32
        $region31: #{tpu_custom_call.1} parent=11 // pred_region
          _
        $region32: #{tpu_custom_call.1} parent=11 // pred_fallthru
          _
        // Predicated region
        $region33: #{tpu_custom_call.1} parent=11 // pred_check
          %p230 = pneg %p166
        $region34: #{tpu_custom_call.1} parent=11 // pred_check_branch
          %232 = sbr.rel (%p230) target = $region36
        $region35: #{tpu_custom_call.1} parent=11 // pred_region
          _
        $region36: #{tpu_custom_call.1} parent=11 // pred_fallthru
          _
      $region12: #{tpu_custom_call.1} parent=5 // pred_fallthru
        _
      %p233 = scmp.lt.s32.totalorder %s14, 2
      // Predicated region
      $region37: #{tpu_custom_call.1} parent=5 // pred_check
        %p234 = pneg %p233
      $region38: #{tpu_custom_call.1} parent=5 // pred_check_branch
        %236 = sbr.rel (%p234) target = $region40
      $region39: #{tpu_custom_call.1} parent=5 // pred_region
        // Predicated region
        $region41: #{tpu_custom_call.1} parent=39 // pred_check
          %p237 = pneg %p34
        $region42: #{tpu_custom_call.1} parent=39 // pred_check_branch
          %239 = sbr.rel (%p237) target = $region44
        $region43: #{tpu_custom_call.1} parent=39 // pred_region
          %s240 = smul.u32 4, %s14
          %p241 = scmp.lt.s32.totalorder %s240, 7
          %s242 = scalar_select %p241, %s240, 7
          %s243 = smul.addr %s242, 8
          %s244 = scalar_lea.vmem %s0, %s243
          %s245 = smul.u32 4, %s14
        $region44: #{tpu_custom_call.1} parent=39 // pred_fallthru
          _
      $region40: #{tpu_custom_call.1} parent=5 // pred_fallthru
        _
      %p246 = scmp.le.s32.totalorder 1, %s14
      %p247 = scmp.lt.s32.totalorder %s14, 3
      %p248 = pnand %p246, %p247
      %p249 = pneg %p248
      // Predicated region
      $region45: #{tpu_custom_call.1} parent=5 // pred_check
        _
      $region46: #{tpu_custom_call.1} parent=5 // pred_check_branch
        %251 = sbr.rel (%p248) target = $region48
      $region47: #{tpu_custom_call.1} parent=5 // pred_region
        %s252 = ssub.s32 %s14, 1
        // Predicated region
        $region49: #{tpu_custom_call.1} parent=47 // pred_check
          %p253 = pneg %p124
        $region50: #{tpu_custom_call.1} parent=47 // pred_check_branch
          %255 = sbr.rel (%p253) target = $region52
        $region51: #{tpu_custom_call.1} parent=47 // pred_region
          %256 = dma.done [#allocation3], 16
        $region52: #{tpu_custom_call.1} parent=47 // pred_fallthru
          _
        %s257 = smul.u32 4, %s19
        %p258 = scmp.lt.s32.totalorder %s257, 7
        %s259 = scalar_select %p258, %s257, 7
        %s260 = smul.addr %s259, 8
        %s261 = scalar_lea.vmem %s0, %s260
        %p262 = pneg %p40
        %p263 = pneg %p37
        %p264 = pneg %p61
        %p265 = pneg %p58
        %p266 = pneg %p82
        %p267 = pneg %p79
        %p268 = pneg %p103
        %p269 = pneg %p100
        %p270 = pneg %p124
        %p271 = pneg %p121
        %p272 = pneg %p145
        %p273 = pneg %p142
        %p274 = pneg %p166
        %p275 = pneg %p163
        %p276 = pneg %p192
        %p277 = pneg %p189
        %s278 = smul.u32 4, %s19
        %p279 = scmp.lt.s32.totalorder %s278, 7
        %s280 = scalar_select %p279, %s278, 7
        %s281 = smul.addr %s280, 8
        %s282 = scalar_lea.vmem %s7, %s281
        %s283 = smul.u32 4, %s19
        %p284 = scmp.lt.s32.totalorder %s283, 7
        %s285 = scalar_select %p284, %s283, 7
        %s286 = smul.addr %s285, 8
        %s287 = scalar_lea.vmem %s0, %s286
        %s288 = smul.u32 4, %s19
        %s289 = smul.u32 4, %s19
        %p290 = scmp.lt.s32.totalorder %s289, 7
        %s291 = scalar_select %p290, %s289, 7
        %s292 = smul.addr %s291, 8
        %s293 = scalar_lea.vmem %s7, %s292
        %s294 = smul.u32 4, %s19
        %v296 = vld [vmem:[%s287] sm:$0xff]
        %v297 = vld [vmem:[%s287 + $0x8] sm:$0xff]
        %v298 = vld [vmem:[%s287 + $0x10] sm:$0xff]
        %v299 = vld [vmem:[%s287 + $0x18] sm:$0xff]
        %v304 = vrot.slane %v296, 1
        %v305 = vrot.slane %v297, 1
        %v306 = vrot.slane %v298, 1
        %v307 = vrot.slane %v299, 1
        %308 = vrot.lane.b32.xlu0 %v304, 8
        %v309 = vpop.permute.xlu0 %308
        %310 = vrot.lane.b32.xlu0 %v305, 8
        %v311 = vpop.permute.xlu0 %310
        %312 = vrot.lane.b32.xlu0 %v306, 8
        %v313 = vpop.permute.xlu0 %312
        %314 = vrot.lane.b32.xlu0 %v307, 8
        %v315 = vpop.permute.xlu0 %314
        %vm320 = vcmask 64512
        %v321 = vsel %vm320, %v296, %v309
        %v322 = vsel %vm320, %v297, %v311
        %v323 = vsel %vm320, %v298, %v313
        %v324 = vsel %vm320, %v299, %v315
        %v329 = vcombine.high %v321, %v321
        %v331 = vunpack.c.l.s4 1966171168
        %v332 = vunpack.c.0.s8 %v331
        %v333 = vlaneseq
        %v334 = vshrl.u32 %v333, 7
        %v335 = vsub.s32 %v332, %v334
        %v336 = vrot.slane %v321, %v335
        %v338 = vunpack.c.l.s4 1966171168
        %v339 = vunpack.c.0.s8 %v338
        %v340 = vlaneseq
        %v341 = vshrl.u32 %v340, 7
        %v342 = vsub.s32 %v339, %v341
        %v343 = vrot.slane %v329, %v342
        %v344 = vcombine.high %v336, %v336
        %v345 = vcombine.high %v343, %v343
        %v347 = vunpack.c.l.s4 1966171168
        %v348 = vunpack.c.0.s8 %v347
        %v349 = vlaneseq
        %v350 = vshrl.u32 %v349, 7
        %v351 = vsub.s32 %v348, %v350
        %v352 = vrot.slane %v336, %v351
        %v354 = vunpack.c.l.s4 1966171168
        %v355 = vunpack.c.0.s8 %v354
        %v356 = vlaneseq
        %v357 = vshrl.u32 %v356, 7
        %v358 = vsub.s32 %v355, %v357
        %v359 = vrot.slane %v343, %v358
        %v361 = vunpack.c.l.s4 1966171168
        %v362 = vunpack.c.0.s8 %v361
        %v363 = vlaneseq
        %v364 = vshrl.u32 %v363, 7
        %v365 = vsub.s32 %v362, %v364
        %v366 = vrot.slane %v344, %v365
        %v368 = vunpack.c.l.s4 1966171168
        %v369 = vunpack.c.0.s8 %v368
        %v370 = vlaneseq
        %v371 = vshrl.u32 %v370, 7
        %v372 = vsub.s32 %v369, %v371
        %v373 = vrot.slane %v345, %v372
        %v374 = vcombine.high %v352, %v352
        %v375 = vcombine.high %v359, %v359
        %v376 = vcombine.high %v366, %v366
        %v377 = vcombine.high %v322, %v322
        %v379 = vunpack.c.l.s4 1966171168
        %v380 = vunpack.c.0.s8 %v379
        %v381 = vlaneseq
        %v382 = vshrl.u32 %v381, 7
        %v383 = vsub.s32 %v380, %v382
        %v384 = vrot.slane %v322, %v383
        %v386 = vunpack.c.l.s4 1966171168
        %v387 = vunpack.c.0.s8 %v386
        %v388 = vlaneseq
        %v389 = vshrl.u32 %v388, 7
        %v390 = vsub.s32 %v387, %v389
        %v391 = vrot.slane %v377, %v390
        %v392 = vcombine.high %v384, %v384
        %v393 = vcombine.high %v391, %v391
        %v395 = vunpack.c.l.s4 1966171168
        %v396 = vunpack.c.0.s8 %v395
        %v397 = vlaneseq
        %v398 = vshrl.u32 %v397, 7
        %v399 = vsub.s32 %v396, %v398
        %v400 = vrot.slane %v384, %v399
        %v402 = vunpack.c.l.s4 1966171168
        %v403 = vunpack.c.0.s8 %v402
        %v404 = vlaneseq
        %v405 = vshrl.u32 %v404, 7
        %v406 = vsub.s32 %v403, %v405
        %v407 = vrot.slane %v391, %v406
        %v409 = vunpack.c.l.s4 1966171168
        %v410 = vunpack.c.0.s8 %v409
        %v411 = vlaneseq
        %v412 = vshrl.u32 %v411, 7
        %v413 = vsub.s32 %v410, %v412
        %v414 = vrot.slane %v392, %v413
        %v416 = vunpack.c.l.s4 1966171168
        %v417 = vunpack.c.0.s8 %v416
        %v418 = vlaneseq
        %v419 = vshrl.u32 %v418, 7
        %v420 = vsub.s32 %v417, %v419
        %v421 = vrot.slane %v393, %v420
        %v422 = vcombine.high %v400, %v400
        %v423 = vcombine.high %v407, %v407
        %v424 = vcombine.high %v414, %v414
        %v425 = vcombine.high %v323, %v323
        %v427 = vunpack.c.l.s4 1966171168
        %v428 = vunpack.c.0.s8 %v427
        %v429 = vlaneseq
        %v430 = vshrl.u32 %v429, 7
        %v431 = vsub.s32 %v428, %v430
        %v432 = vrot.slane %v323, %v431
        %v434 = vunpack.c.l.s4 1966171168
        %v435 = vunpack.c.0.s8 %v434
        %v436 = vlaneseq
        %v437 = vshrl.u32 %v436, 7
        %v438 = vsub.s32 %v435, %v437
        %v439 = vrot.slane %v425, %v438
        %v440 = vcombine.high %v432, %v432
        %v441 = vcombine.high %v439, %v439
        %v443 = vunpack.c.l.s4 1966171168
        %v444 = vunpack.c.0.s8 %v443
        %v445 = vlaneseq
        %v446 = vshrl.u32 %v445, 7
        %v447 = vsub.s32 %v444, %v446
        %v448 = vrot.slane %v432, %v447
        %v450 = vunpack.c.l.s4 1966171168
        %v451 = vunpack.c.0.s8 %v450
        %v452 = vlaneseq
        %v453 = vshrl.u32 %v452, 7
        %v454 = vsub.s32 %v451, %v453
        %v455 = vrot.slane %v439, %v454
        %v457 = vunpack.c.l.s4 1966171168
        %v458 = vunpack.c.0.s8 %v457
        %v459 = vlaneseq
        %v460 = vshrl.u32 %v459, 7
        %v461 = vsub.s32 %v458, %v460
        %v462 = vrot.slane %v440, %v461
        %v464 = vunpack.c.l.s4 1966171168
        %v465 = vunpack.c.0.s8 %v464
        %v466 = vlaneseq
        %v467 = vshrl.u32 %v466, 7
        %v468 = vsub.s32 %v465, %v467
        %v469 = vrot.slane %v441, %v468
        %v470 = vcombine.high %v448, %v448
        %v471 = vcombine.high %v455, %v455
        %v472 = vcombine.high %v462, %v462
        %v473 = vcombine.high %v324, %v324
        %v475 = vunpack.c.l.s4 1966171168
        %v476 = vunpack.c.0.s8 %v475
        %v477 = vlaneseq
        %v478 = vshrl.u32 %v477, 7
        %v479 = vsub.s32 %v476, %v478
        %v480 = vrot.slane %v324, %v479
        %v482 = vunpack.c.l.s4 1966171168
        %v483 = vunpack.c.0.s8 %v482
        %v484 = vlaneseq
        %v485 = vshrl.u32 %v484, 7
        %v486 = vsub.s32 %v483, %v485
        %v487 = vrot.slane %v473, %v486
        %v488 = vcombine.high %v480, %v480
        %v489 = vcombine.high %v487, %v487
        %v491 = vunpack.c.l.s4 1966171168
        %v492 = vunpack.c.0.s8 %v491
        %v493 = vlaneseq
        %v494 = vshrl.u32 %v493, 7
        %v495 = vsub.s32 %v492, %v494
        %v496 = vrot.slane %v480, %v495
        %v498 = vunpack.c.l.s4 1966171168
        %v499 = vunpack.c.0.s8 %v498
        %v500 = vlaneseq
        %v501 = vshrl.u32 %v500, 7
        %v502 = vsub.s32 %v499, %v501
        %v503 = vrot.slane %v487, %v502
        %v505 = vunpack.c.l.s4 1966171168
        %v506 = vunpack.c.0.s8 %v505
        %v507 = vlaneseq
        %v508 = vshrl.u32 %v507, 7
        %v509 = vsub.s32 %v506, %v508
        %v510 = vrot.slane %v488, %v509
        %v512 = vunpack.c.l.s4 1966171168
        %v513 = vunpack.c.0.s8 %v512
        %v514 = vlaneseq
        %v515 = vshrl.u32 %v514, 7
        %v516 = vsub.s32 %v513, %v515
        %v517 = vrot.slane %v489, %v516
        %v518 = vcombine.high %v496, %v496
        %v519 = vcombine.high %v503, %v503
        %v520 = vcombine.high %v510, %v510
        %v521 = vcombine.low %v352, %v366
        %v522 = vcombine.low %v374, %v376
        %v523 = vcombine.low %v359, %v373
        %v524 = vcombine.low %v375, %v400
        %v526 = vunpack.c.l.s4 1966171168
        %v527 = vunpack.c.0.s8 %v526
        %v528 = vlaneseq
        %v529 = vshrl.u32 %v528, 7
        %v530 = vsub.s32 %v527, %v529
        %v531 = vrot.slane %v521, %v530
        %v533 = vunpack.c.l.s4 1966171168
        %v534 = vunpack.c.0.s8 %v533
        %v535 = vlaneseq
        %v536 = vshrl.u32 %v535, 7
        %v537 = vsub.s32 %v534, %v536
        %v538 = vrot.slane %v522, %v537
        %v540 = vunpack.c.l.s4 1966171168
        %v541 = vunpack.c.0.s8 %v540
        %v542 = vlaneseq
        %v543 = vshrl.u32 %v542, 7
        %v544 = vsub.s32 %v541, %v543
        %v545 = vrot.slane %v523, %v544
        %v547 = vunpack.c.l.s4 1966171168
        %v548 = vunpack.c.0.s8 %v547
        %v549 = vlaneseq
        %v550 = vshrl.u32 %v549, 7
        %v551 = vsub.s32 %v548, %v550
        %v552 = vrot.slane %v524, %v551
        %v553 = vcombine.low %v531, %v538
        %v554 = vcombine.low %v545, %v552
        %v556 = vunpack.c.l.s4 1966171168
        %v557 = vunpack.c.0.s8 %v556
        %v558 = vlaneseq
        %v559 = vshrl.u32 %v558, 7
        %v560 = vsub.s32 %v557, %v559
        %v561 = vrot.slane %v553, %v560
        %v563 = vunpack.c.l.s4 1966171168
        %v564 = vunpack.c.0.s8 %v563
        %v565 = vlaneseq
        %v566 = vshrl.u32 %v565, 7
        %v567 = vsub.s32 %v564, %v566
        %v568 = vrot.slane %v554, %v567
        %v569 = vcombine.low %v561, %v568
        %v570 = vcombine.low %v414, %v422
        %v571 = vcombine.low %v424, %v407
        %v572 = vcombine.low %v421, %v423
        %v573 = vcombine.low %v448, %v462
        %v575 = vunpack.c.l.s4 1966171168
        %v576 = vunpack.c.0.s8 %v575
        %v577 = vlaneseq
        %v578 = vshrl.u32 %v577, 7
        %v579 = vsub.s32 %v576, %v578
        %v580 = vrot.slane %v570, %v579
        %v582 = vunpack.c.l.s4 1966171168
        %v583 = vunpack.c.0.s8 %v582
        %v584 = vlaneseq
        %v585 = vshrl.u32 %v584, 7
        %v586 = vsub.s32 %v583, %v585
        %v587 = vrot.slane %v571, %v586
        %v589 = vunpack.c.l.s4 1966171168
        %v590 = vunpack.c.0.s8 %v589
        %v591 = vlaneseq
        %v592 = vshrl.u32 %v591, 7
        %v593 = vsub.s32 %v590, %v592
        %v594 = vrot.slane %v572, %v593
        %v596 = vunpack.c.l.s4 1966171168
        %v597 = vunpack.c.0.s8 %v596
        %v598 = vlaneseq
        %v599 = vshrl.u32 %v598, 7
        %v600 = vsub.s32 %v597, %v599
        %v601 = vrot.slane %v573, %v600
        %v602 = vcombine.low %v580, %v587
        %v603 = vcombine.low %v594, %v601
        %v605 = vunpack.c.l.s4 1966171168
        %v606 = vunpack.c.0.s8 %v605
        %v607 = vlaneseq
        %v608 = vshrl.u32 %v607, 7
        %v609 = vsub.s32 %v606, %v608
        %v610 = vrot.slane %v602, %v609
        %v612 = vunpack.c.l.s4 1966171168
        %v613 = vunpack.c.0.s8 %v612
        %v614 = vlaneseq
        %v615 = vshrl.u32 %v614, 7
        %v616 = vsub.s32 %v613, %v615
        %v617 = vrot.slane %v603, %v616
        %v618 = vcombine.low %v610, %v617
        %v619 = vcombine.low %v470, %v472
        %v620 = vcombine.low %v455, %v469
        %v621 = vcombine.low %v471, %v496
        %v622 = vcombine.low %v510, %v518
        %v624 = vunpack.c.l.s4 1966171168
        %v625 = vunpack.c.0.s8 %v624
        %v626 = vlaneseq
        %v627 = vshrl.u32 %v626, 7
        %v628 = vsub.s32 %v625, %v627
        %v629 = vrot.slane %v619, %v628
        %v631 = vunpack.c.l.s4 1966171168
        %v632 = vunpack.c.0.s8 %v631
        %v633 = vlaneseq
        %v634 = vshrl.u32 %v633, 7
        %v635 = vsub.s32 %v632, %v634
        %v636 = vrot.slane %v620, %v635
        %v638 = vunpack.c.l.s4 1966171168
        %v639 = vunpack.c.0.s8 %v638
        %v640 = vlaneseq
        %v641 = vshrl.u32 %v640, 7
        %v642 = vsub.s32 %v639, %v641
        %v643 = vrot.slane %v621, %v642
        %v645 = vunpack.c.l.s4 1966171168
        %v646 = vunpack.c.0.s8 %v645
        %v647 = vlaneseq
        %v648 = vshrl.u32 %v647, 7
        %v649 = vsub.s32 %v646, %v648
        %v650 = vrot.slane %v622, %v649
        %v651 = vcombine.low %v629, %v636
        %v652 = vcombine.low %v643, %v650
        %v654 = vunpack.c.l.s4 1966171168
        %v655 = vunpack.c.0.s8 %v654
        %v656 = vlaneseq
        %v657 = vshrl.u32 %v656, 7
        %v658 = vsub.s32 %v655, %v657
        %v659 = vrot.slane %v651, %v658
        %v661 = vunpack.c.l.s4 1966171168
        %v662 = vunpack.c.0.s8 %v661
        %v663 = vlaneseq
        %v664 = vshrl.u32 %v663, 7
        %v665 = vsub.s32 %v662, %v664
        %v666 = vrot.slane %v652, %v665
        %v667 = vcombine.low %v659, %v666
        %v668 = vcombine.low %v520, %v503
        %v669 = vcombine.low %v517, %v519
        %v671 = vunpack.c.l.s4 1966171168
        %v672 = vunpack.c.0.s8 %v671
        %v673 = vlaneseq
        %v674 = vshrl.u32 %v673, 7
        %v675 = vsub.s32 %v672, %v674
        %v676 = vrot.slane %v668, %v675
        %v678 = vunpack.c.l.s4 1966171168
        %v679 = vunpack.c.0.s8 %v678
        %v680 = vlaneseq
        %v681 = vshrl.u32 %v680, 7
        %v682 = vsub.s32 %v679, %v681
        %v683 = vrot.slane %v669, %v682
        %v684 = vcombine.low %v676, %v683
        %v686 = vunpack.c.l.s4 1966171168
        %v687 = vunpack.c.0.s8 %v686
        %v688 = vlaneseq
        %v689 = vshrl.u32 %v688, 7
        %v690 = vsub.s32 %v687, %v689
        %v691 = vrot.slane %v684, %v690
        %v696 = vpack.c.bf16 %v618, %v569
        %v697 = vpack.c.bf16 %v691, %v667
        %v698 = vld [vmem:[%s1] sm:$0xf]
        %v699 = vld [vmem:[%s1 + $0x4] sm:$0x3]
        %v700 = vld [vmem:[%s2] sm:$0x1]
        %v702 = vlaneseq
        %v703 = vshrl.u32 %v702, 7
        %v704 = vsub.s32 0, %v703
        %v705 = vrot.slane %v700, %v704
        %v709 = vunpack.c.l.b16 %v698
        %v710 = vunpack.c.l.b16 %v699
        %v711 = vpack.c.b16 %v710, %v709
        %vm712 = vcmask 97280
        %v714 = vsel %vm712, %v696, 0
        %v717 = vsel %vm712, %v697, 0
        %vm719 = vcmask 1045504
        %v721 = vsel %vm719, %v711, 0
        %723 = vmatprep.subr.bf16.mxu0 0
        %724 = vmatpush1.bf16.msra.mxu0 0
        %725 = vmatprep.subr.bf16.mxu0 0
        %726 = vmatpush1.bf16.msra.mxu0 0
        %727 = vmatprep.subr.bf16.mxu0 0
        %728 = vmatpush1.bf16.msra.mxu0 0
        %729 = vmatprep.subr.bf16.mxu0 0
        %730 = vmatpush1.bf16.msra.mxu0 0
        %731 = vmatprep.subr.bf16.mxu0 0
        %732 = vmatpush1.bf16.msra.mxu0 0
        %733 = vmatprep.subr.bf16.mxu0 0
        %734 = vmatpush1.bf16.msra.mxu0 0
        %735 = vmatprep.subr.bf16.mxu0 0
        %736 = vmatpush1.bf16.msra.mxu0 0
        %737 = vmatprep.subr.bf16.mxu0 0
        %738 = vmatpush1.bf16.msra.mxu0 %v721
        %739 = vmatprep.subr.bf16.mxu0 0
        %740 = vmatpush2.bf16.msra.mxu0 0
        %741 = vmatprep.subr.bf16.mxu0 0
        %742 = vmatpush2.bf16.msra.mxu0 0
        %743 = vmatprep.subr.bf16.mxu0 0
        %744 = vmatpush2.bf16.msra.mxu0 0
        %745 = vmatprep.subr.bf16.mxu0 0
        %746 = vmatpush2.bf16.msra.mxu0 0
        %747 = vmatprep.subr.bf16.mxu0 0
        %748 = vmatpush2.bf16.msra.mxu0 0
        %749 = vmatprep.subr.bf16.mxu0 0
        %750 = vmatpush2.bf16.msra.mxu0 0
        %751 = vmatprep.subr.bf16.mxu0 0
        %752 = vmatpush2.bf16.msra.mxu0 0
        %753 = vmatprep.subr.bf16.mxu0 0
        %754 = vmatpush2.bf16.msra.mxu0 0
        %755 = vmatprep.mubr.bf16.mxu0 0
        %756 = vmatmul.mubr.bf16.gmra.mxu0 %v714
        %v757 = vpop.f32.mrf.mxu0
        %v758 = vadd.f32 %v705, %v757
        %v759 = vpop.f32.mrf.mxu0
        %v760 = vpop.f32.mrf.mxu0
        %v761 = vadd.f32 %v705, %v760
        %v762 = vpop.f32.mrf.mxu0
        %763 = vmatprep.mubr.bf16.mxu0 0
        %764 = vmatmul.mubr.bf16.gmra.mxu0 %v717
        %v765 = vpop.f32.mrf.mxu0
        %v766 = vadd.f32 %v705, %v765
        %v767 = vpop.f32.mrf.mxu0
        %v768 = vpop.f32.mrf.mxu0
        %v769 = vadd.f32 %v705, %v768
        %v770 = vpop.f32.mrf.mxu0
        %771 = vdwg.mxu0
        %v772 = vmax.f32 %v758, 0.0
        %v773 = vmax.f32 %v761, 0.0
        %v774 = vmax.f32 %v766, 0.0
        %v775 = vmax.f32 %v769, 0.0
        %v780 = vcombine.high %v772, %v772
        %v782 = vunpack.c.l.s4 1966171168
        %v783 = vunpack.c.0.s8 %v782
        %v784 = vlaneseq
        %v785 = vshrl.u32 %v784, 7
        %v786 = vsub.s32 %v783, %v785
        %v787 = vrot.slane %v772, %v786
        %v789 = vunpack.c.l.s4 1966171168
        %v790 = vunpack.c.0.s8 %v789
        %v791 = vlaneseq
        %v792 = vshrl.u32 %v791, 7
        %v793 = vsub.s32 %v790, %v792
        %v794 = vrot.slane %v780, %v793
        %v795 = vcombine.high %v787, %v787
        %v796 = vcombine.high %v794, %v794
        %v798 = vunpack.c.l.s4 1966171168
        %v799 = vunpack.c.0.s8 %v798
        %v800 = vlaneseq
        %v801 = vshrl.u32 %v800, 7
        %v802 = vsub.s32 %v799, %v801
        %v803 = vrot.slane %v787, %v802
        %v805 = vunpack.c.l.s4 1966171168
        %v806 = vunpack.c.0.s8 %v805
        %v807 = vlaneseq
        %v808 = vshrl.u32 %v807, 7
        %v809 = vsub.s32 %v806, %v808
        %v810 = vrot.slane %v794, %v809
        %v812 = vunpack.c.l.s4 1966171168
        %v813 = vunpack.c.0.s8 %v812
        %v814 = vlaneseq
        %v815 = vshrl.u32 %v814, 7
        %v816 = vsub.s32 %v813, %v815
        %v817 = vrot.slane %v795, %v816
        %v819 = vunpack.c.l.s4 1966171168
        %v820 = vunpack.c.0.s8 %v819
        %v821 = vlaneseq
        %v822 = vshrl.u32 %v821, 7
        %v823 = vsub.s32 %v820, %v822
        %v824 = vrot.slane %v796, %v823
        %v825 = vcombine.high %v803, %v803
        %v826 = vcombine.high %v810, %v810
        %v827 = vcombine.high %v817, %v817
        %v828 = vcombine.high %v824, %v824
        %v829 = vcombine.high %v773, %v773
        %v831 = vunpack.c.l.s4 1966171168
        %v832 = vunpack.c.0.s8 %v831
        %v833 = vlaneseq
        %v834 = vshrl.u32 %v833, 7
        %v835 = vsub.s32 %v832, %v834
        %v836 = vrot.slane %v773, %v835
        %v838 = vunpack.c.l.s4 1966171168
        %v839 = vunpack.c.0.s8 %v838
        %v840 = vlaneseq
        %v841 = vshrl.u32 %v840, 7
        %v842 = vsub.s32 %v839, %v841
        %v843 = vrot.slane %v829, %v842
        %v844 = vcombine.high %v836, %v836
        %v845 = vcombine.high %v843, %v843
        %v847 = vunpack.c.l.s4 1966171168
        %v848 = vunpack.c.0.s8 %v847
        %v849 = vlaneseq
        %v850 = vshrl.u32 %v849, 7
        %v851 = vsub.s32 %v848, %v850
        %v852 = vrot.slane %v836, %v851
        %v854 = vunpack.c.l.s4 1966171168
        %v855 = vunpack.c.0.s8 %v854
        %v856 = vlaneseq
        %v857 = vshrl.u32 %v856, 7
        %v858 = vsub.s32 %v855, %v857
        %v859 = vrot.slane %v843, %v858
        %v861 = vunpack.c.l.s4 1966171168
        %v862 = vunpack.c.0.s8 %v861
        %v863 = vlaneseq
        %v864 = vshrl.u32 %v863, 7
        %v865 = vsub.s32 %v862, %v864
        %v866 = vrot.slane %v844, %v865
        %v868 = vunpack.c.l.s4 1966171168
        %v869 = vunpack.c.0.s8 %v868
        %v870 = vlaneseq
        %v871 = vshrl.u32 %v870, 7
        %v872 = vsub.s32 %v869, %v871
        %v873 = vrot.slane %v845, %v872
        %v874 = vcombine.high %v852, %v852
        %v875 = vcombine.high %v859, %v859
        %v876 = vcombine.high %v866, %v866
        %v877 = vcombine.high %v873, %v873
        %v878 = vcombine.high %v774, %v774
        %v880 = vunpack.c.l.s4 1966171168
        %v881 = vunpack.c.0.s8 %v880
        %v882 = vlaneseq
        %v883 = vshrl.u32 %v882, 7
        %v884 = vsub.s32 %v881, %v883
        %v885 = vrot.slane %v774, %v884
        %v887 = vunpack.c.l.s4 1966171168
        %v888 = vunpack.c.0.s8 %v887
        %v889 = vlaneseq
        %v890 = vshrl.u32 %v889, 7
        %v891 = vsub.s32 %v888, %v890
        %v892 = vrot.slane %v878, %v891
        %v893 = vcombine.high %v885, %v885
        %v894 = vcombine.high %v892, %v892
        %v896 = vunpack.c.l.s4 1966171168
        %v897 = vunpack.c.0.s8 %v896
        %v898 = vlaneseq
        %v899 = vshrl.u32 %v898, 7
        %v900 = vsub.s32 %v897, %v899
        %v901 = vrot.slane %v885, %v900
        %v903 = vunpack.c.l.s4 1966171168
        %v904 = vunpack.c.0.s8 %v903
        %v905 = vlaneseq
        %v906 = vshrl.u32 %v905, 7
        %v907 = vsub.s32 %v904, %v906
        %v908 = vrot.slane %v892, %v907
        %v910 = vunpack.c.l.s4 1966171168
        %v911 = vunpack.c.0.s8 %v910
        %v912 = vlaneseq
        %v913 = vshrl.u32 %v912, 7
        %v914 = vsub.s32 %v911, %v913
        %v915 = vrot.slane %v893, %v914
        %v917 = vunpack.c.l.s4 1966171168
        %v918 = vunpack.c.0.s8 %v917
        %v919 = vlaneseq
        %v920 = vshrl.u32 %v919, 7
        %v921 = vsub.s32 %v918, %v920
        %v922 = vrot.slane %v894, %v921
        %v923 = vcombine.high %v901, %v901
        %v924 = vcombine.high %v908, %v908
        %v925 = vcombine.high %v915, %v915
        %v926 = vcombine.high %v922, %v922
        %v928 = vunpack.c.l.s4 1966171168
        %v929 = vunpack.c.0.s8 %v928
        %v930 = vlaneseq
        %v931 = vshrl.u32 %v930, 7
        %v932 = vsub.s32 %v929, %v931
        %v933 = vrot.slane %v775, %v932
        %v934 = vcombine.high %v933, %v933
        %v936 = vunpack.c.l.s4 1966171168
        %v937 = vunpack.c.0.s8 %v936
        %v938 = vlaneseq
        %v939 = vshrl.u32 %v938, 7
        %v940 = vsub.s32 %v937, %v939
        %v941 = vrot.slane %v933, %v940
        %v943 = vunpack.c.l.s4 1966171168
        %v944 = vunpack.c.0.s8 %v943
        %v945 = vlaneseq
        %v946 = vshrl.u32 %v945, 7
        %v947 = vsub.s32 %v944, %v946
        %v948 = vrot.slane %v934, %v947
        %v949 = vcombine.high %v941, %v941
        %v950 = vcombine.high %v948, %v948
        %v951 = vcombine.low %v803, %v803
        %v952 = vcombine.low %v817, %v825
        %v953 = vcombine.low %v827, %v810
        %v954 = vcombine.low %v824, %v826
        %v956 = vunpack.c.l.s4 1966171168
        %v957 = vunpack.c.0.s8 %v956
        %v958 = vlaneseq
        %v959 = vshrl.u32 %v958, 7
        %v960 = vsub.s32 %v957, %v959
        %v961 = vrot.slane %v951, %v960
        %v963 = vunpack.c.l.s4 1966171168
        %v964 = vunpack.c.0.s8 %v963
        %v965 = vlaneseq
        %v966 = vshrl.u32 %v965, 7
        %v967 = vsub.s32 %v964, %v966
        %v968 = vrot.slane %v952, %v967
        %v970 = vunpack.c.l.s4 1966171168
        %v971 = vunpack.c.0.s8 %v970
        %v972 = vlaneseq
        %v973 = vshrl.u32 %v972, 7
        %v974 = vsub.s32 %v971, %v973
        %v975 = vrot.slane %v953, %v974
        %v977 = vunpack.c.l.s4 1966171168
        %v978 = vunpack.c.0.s8 %v977
        %v979 = vlaneseq
        %v980 = vshrl.u32 %v979, 7
        %v981 = vsub.s32 %v978, %v980
        %v982 = vrot.slane %v954, %v981
        %v983 = vcombine.low %v961, %v968
        %v984 = vcombine.low %v975, %v982
        %v986 = vunpack.c.l.s4 1966171168
        %v987 = vunpack.c.0.s8 %v986
        %v988 = vlaneseq
        %v989 = vshrl.u32 %v988, 7
        %v990 = vsub.s32 %v987, %v989
        %v991 = vrot.slane %v983, %v990
        %v993 = vunpack.c.l.s4 1966171168
        %v994 = vunpack.c.0.s8 %v993
        %v995 = vlaneseq
        %v996 = vshrl.u32 %v995, 7
        %v997 = vsub.s32 %v994, %v996
        %v998 = vrot.slane %v984, %v997
        %v999 = vcombine.low %v991, %v998
        %v1000 = vcombine.low %v828, %v828
        %v1001 = vcombine.low %v852, %v866
        %v1002 = vcombine.low %v874, %v876
        %v1003 = vcombine.low %v859, %v873
        %v1005 = vunpack.c.l.s4 1966171168
        %v1006 = vunpack.c.0.s8 %v1005
        %v1007 = vlaneseq
        %v1008 = vshrl.u32 %v1007, 7
        %v1009 = vsub.s32 %v1006, %v1008
        %v1010 = vrot.slane %v1000, %v1009
        %v1012 = vunpack.c.l.s4 1966171168
        %v1013 = vunpack.c.0.s8 %v1012
        %v1014 = vlaneseq
        %v1015 = vshrl.u32 %v1014, 7
        %v1016 = vsub.s32 %v1013, %v1015
        %v1017 = vrot.slane %v1001, %v1016
        %v1019 = vunpack.c.l.s4 1966171168
        %v1020 = vunpack.c.0.s8 %v1019
        %v1021 = vlaneseq
        %v1022 = vshrl.u32 %v1021, 7
        %v1023 = vsub.s32 %v1020, %v1022
        %v1024 = vrot.slane %v1002, %v1023
        %v1026 = vunpack.c.l.s4 1966171168
        %v1027 = vunpack.c.0.s8 %v1026
        %v1028 = vlaneseq
        %v1029 = vshrl.u32 %v1028, 7
        %v1030 = vsub.s32 %v1027, %v1029
        %v1031 = vrot.slane %v1003, %v1030
        %v1032 = vcombine.low %v1010, %v1017
        %v1033 = vcombine.low %v1024, %v1031
        %v1035 = vunpack.c.l.s4 1966171168
        %v1036 = vunpack.c.0.s8 %v1035
        %v1037 = vlaneseq
        %v1038 = vshrl.u32 %v1037, 7
        %v1039 = vsub.s32 %v1036, %v1038
        %v1040 = vrot.slane %v1032, %v1039
        %v1042 = vunpack.c.l.s4 1966171168
        %v1043 = vunpack.c.0.s8 %v1042
        %v1044 = vlaneseq
        %v1045 = vshrl.u32 %v1044, 7
        %v1046 = vsub.s32 %v1043, %v1045
        %v1047 = vrot.slane %v1033, %v1046
        %v1048 = vcombine.low %v1040, %v1047
        %v1049 = vcombine.low %v875, %v875
        %v1050 = vcombine.low %v877, %v901
        %v1051 = vcombine.low %v915, %v923
        %v1052 = vcombine.low %v925, %v908
        %v1054 = vunpack.c.l.s4 1966171168
        %v1055 = vunpack.c.0.s8 %v1054
        %v1056 = vlaneseq
        %v1057 = vshrl.u32 %v1056, 7
        %v1058 = vsub.s32 %v1055, %v1057
        %v1059 = vrot.slane %v1049, %v1058
        %v1061 = vunpack.c.l.s4 1966171168
        %v1062 = vunpack.c.0.s8 %v1061
        %v1063 = vlaneseq
        %v1064 = vshrl.u32 %v1063, 7
        %v1065 = vsub.s32 %v1062, %v1064
        %v1066 = vrot.slane %v1050, %v1065
        %v1068 = vunpack.c.l.s4 1966171168
        %v1069 = vunpack.c.0.s8 %v1068
        %v1070 = vlaneseq
        %v1071 = vshrl.u32 %v1070, 7
        %v1072 = vsub.s32 %v1069, %v1071
        %v1073 = vrot.slane %v1051, %v1072
        %v1075 = vunpack.c.l.s4 1966171168
        %v1076 = vunpack.c.0.s8 %v1075
        %v1077 = vlaneseq
        %v1078 = vshrl.u32 %v1077, 7
        %v1079 = vsub.s32 %v1076, %v1078
        %v1080 = vrot.slane %v1052, %v1079
        %v1081 = vcombine.low %v1059, %v1066
        %v1082 = vcombine.low %v1073, %v1080
        %v1084 = vunpack.c.l.s4 1966171168
        %v1085 = vunpack.c.0.s8 %v1084
        %v1086 = vlaneseq
        %v1087 = vshrl.u32 %v1086, 7
        %v1088 = vsub.s32 %v1085, %v1087
        %v1089 = vrot.slane %v1081, %v1088
        %v1091 = vunpack.c.l.s4 1966171168
        %v1092 = vunpack.c.0.s8 %v1091
        %v1093 = vlaneseq
        %v1094 = vshrl.u32 %v1093, 7
        %v1095 = vsub.s32 %v1092, %v1094
        %v1096 = vrot.slane %v1082, %v1095
        %v1097 = vcombine.low %v1089, %v1096
        %v1098 = vcombine.low %v922, %v922
        %v1099 = vcombine.low %v924, %v926
        %v1100 = vcombine.low %v941, %v948
        %v1101 = vcombine.low %v949, %v950
        %v1103 = vunpack.c.l.s4 1966171168
        %v1104 = vunpack.c.0.s8 %v1103
        %v1105 = vlaneseq
        %v1106 = vshrl.u32 %v1105, 7
        %v1107 = vsub.s32 %v1104, %v1106
        %v1108 = vrot.slane %v1098, %v1107
        %v1110 = vunpack.c.l.s4 1966171168
        %v1111 = vunpack.c.0.s8 %v1110
        %v1112 = vlaneseq
        %v1113 = vshrl.u32 %v1112, 7
        %v1114 = vsub.s32 %v1111, %v1113
        %v1115 = vrot.slane %v1099, %v1114
        %v1117 = vunpack.c.l.s4 1966171168
        %v1118 = vunpack.c.0.s8 %v1117
        %v1119 = vlaneseq
        %v1120 = vshrl.u32 %v1119, 7
        %v1121 = vsub.s32 %v1118, %v1120
        %v1122 = vrot.slane %v1100, %v1121
        %v1124 = vunpack.c.l.s4 1966171168
        %v1125 = vunpack.c.0.s8 %v1124
        %v1126 = vlaneseq
        %v1127 = vshrl.u32 %v1126, 7
        %v1128 = vsub.s32 %v1125, %v1127
        %v1129 = vrot.slane %v1101, %v1128
        %v1130 = vcombine.low %v1108, %v1115
        %v1131 = vcombine.low %v1122, %v1129
        %v1133 = vunpack.c.l.s4 1966171168
        %v1134 = vunpack.c.0.s8 %v1133
        %v1135 = vlaneseq
        %v1136 = vshrl.u32 %v1135, 7
        %v1137 = vsub.s32 %v1134, %v1136
        %v1138 = vrot.slane %v1130, %v1137
        %v1140 = vunpack.c.l.s4 1966171168
        %v1141 = vunpack.c.0.s8 %v1140
        %v1142 = vlaneseq
        %v1143 = vshrl.u32 %v1142, 7
        %v1144 = vsub.s32 %v1141, %v1143
        %v1145 = vrot.slane %v1131, %v1144
        %v1146 = vcombine.low %v1138, %v1145
        %vm1151 = vcmask 1040384
        %v1152 = vsel %vm1151, 0.0, %v999
        %v1153 = vsel %vm1151, 0.0, %v1048
        %v1154 = vsel %vm1151, 0.0, %v1097
        %v1155 = vsel %vm1151, 0.0, %v1146
        %v1160 = vrot.slane %v1152, 1
        %v1161 = vrot.slane %v1153, 1
        %v1162 = vrot.slane %v1154, 1
        %v1163 = vrot.slane %v1155, 1
        %1164 = vrot.lane.b32.xlu0 %v1160, 8
        %v1165 = vpop.permute.xlu0 %1164
        %1166 = vrot.lane.b32.xlu0 %v1161, 8
        %v1167 = vpop.permute.xlu0 %1166
        %1168 = vrot.lane.b32.xlu0 %v1162, 8
        %v1169 = vpop.permute.xlu0 %1168
        %1170 = vrot.lane.b32.xlu0 %v1163, 8
        %v1171 = vpop.permute.xlu0 %1170
        %v1177 = vrot.slane %v1152, 2
        %v1178 = vrot.slane 0.0, 2
        %v1179 = vsel %vm719, %v1177, %v1178
        %v1180 = vrot.slane %v1153, 2
        %v1181 = vsel %vm719, %v1180, %v1178
        %v1182 = vrot.slane %v1154, 2
        %v1183 = vsel %vm719, %v1182, %v1178
        %v1184 = vrot.slane %v1155, 2
        %v1185 = vsel %vm719, %v1184, %v1178
        %1186 = vrot.lane.b32.xlu0 %v1179, 16
        %v1187 = vpop.permute.xlu0 %1186
        %1188 = vrot.lane.b32.xlu0 %v1181, 16
        %v1189 = vpop.permute.xlu0 %1188
        %1190 = vrot.lane.b32.xlu0 %v1183, 16
        %v1191 = vpop.permute.xlu0 %1190
        %1192 = vrot.lane.b32.xlu0 %v1185, 16
        %v1193 = vpop.permute.xlu0 %1192
        %v1198 = vsel %vm320, %v1152, %v1165
        %v1199 = vsel %vm320, %v1153, %v1167
        %v1200 = vsel %vm320, %v1154, %v1169
        %v1201 = vsel %vm320, %v1155, %v1171
        %vm1202 = vcmask 130048
        %v1203 = vsel %vm1202, %v1198, %v1187
        %v1204 = vsel %vm1202, %v1199, %v1189
        %v1205 = vsel %vm1202, %v1200, %v1191
        %v1206 = vsel %vm1202, %v1201, %v1193
        %v1211 = vcombine.high %v1203, %v1203
        %v1213 = vunpack.c.l.s4 1966171168
        %v1214 = vunpack.c.0.s8 %v1213
        %v1215 = vlaneseq
        %v1216 = vshrl.u32 %v1215, 7
        %v1217 = vsub.s32 %v1214, %v1216
        %v1218 = vrot.slane %v1203, %v1217
        %v1220 = vunpack.c.l.s4 1966171168
        %v1221 = vunpack.c.0.s8 %v1220
        %v1222 = vlaneseq
        %v1223 = vshrl.u32 %v1222, 7
        %v1224 = vsub.s32 %v1221, %v1223
        %v1225 = vrot.slane %v1211, %v1224
        %v1226 = vcombine.high %v1218, %v1218
        %v1227 = vcombine.high %v1225, %v1225
        %v1229 = vunpack.c.l.s4 1966171168
        %v1230 = vunpack.c.0.s8 %v1229
        %v1231 = vlaneseq
        %v1232 = vshrl.u32 %v1231, 7
        %v1233 = vsub.s32 %v1230, %v1232
        %v1234 = vrot.slane %v1218, %v1233
        %v1236 = vunpack.c.l.s4 1966171168
        %v1237 = vunpack.c.0.s8 %v1236
        %v1238 = vlaneseq
        %v1239 = vshrl.u32 %v1238, 7
        %v1240 = vsub.s32 %v1237, %v1239
        %v1241 = vrot.slane %v1225, %v1240
        %v1243 = vunpack.c.l.s4 1966171168
        %v1244 = vunpack.c.0.s8 %v1243
        %v1245 = vlaneseq
        %v1246 = vshrl.u32 %v1245, 7
        %v1247 = vsub.s32 %v1244, %v1246
        %v1248 = vrot.slane %v1226, %v1247
        %v1250 = vunpack.c.l.s4 1966171168
        %v1251 = vunpack.c.0.s8 %v1250
        %v1252 = vlaneseq
        %v1253 = vshrl.u32 %v1252, 7
        %v1254 = vsub.s32 %v1251, %v1253
        %v1255 = vrot.slane %v1227, %v1254
        %v1256 = vcombine.high %v1234, %v1234
        %v1257 = vcombine.high %v1241, %v1241
        %v1258 = vcombine.high %v1248, %v1248
        %v1259 = vcombine.high %v1204, %v1204
        %v1261 = vunpack.c.l.s4 1966171168
        %v1262 = vunpack.c.0.s8 %v1261
        %v1263 = vlaneseq
        %v1264 = vshrl.u32 %v1263, 7
        %v1265 = vsub.s32 %v1262, %v1264
        %v1266 = vrot.slane %v1204, %v1265
        %v1268 = vunpack.c.l.s4 1966171168
        %v1269 = vunpack.c.0.s8 %v1268
        %v1270 = vlaneseq
        %v1271 = vshrl.u32 %v1270, 7
        %v1272 = vsub.s32 %v1269, %v1271
        %v1273 = vrot.slane %v1259, %v1272
        %v1274 = vcombine.high %v1266, %v1266
        %v1275 = vcombine.high %v1273, %v1273
        %v1277 = vunpack.c.l.s4 1966171168
        %v1278 = vunpack.c.0.s8 %v1277
        %v1279 = vlaneseq
        %v1280 = vshrl.u32 %v1279, 7
        %v1281 = vsub.s32 %v1278, %v1280
        %v1282 = vrot.slane %v1266, %v1281
        %v1284 = vunpack.c.l.s4 1966171168
        %v1285 = vunpack.c.0.s8 %v1284
        %v1286 = vlaneseq
        %v1287 = vshrl.u32 %v1286, 7
        %v1288 = vsub.s32 %v1285, %v1287
        %v1289 = vrot.slane %v1273, %v1288
        %v1291 = vunpack.c.l.s4 1966171168
        %v1292 = vunpack.c.0.s8 %v1291
        %v1293 = vlaneseq
        %v1294 = vshrl.u32 %v1293, 7
        %v1295 = vsub.s32 %v1292, %v1294
        %v1296 = vrot.slane %v1274, %v1295
        %v1298 = vunpack.c.l.s4 1966171168
        %v1299 = vunpack.c.0.s8 %v1298
        %v1300 = vlaneseq
        %v1301 = vshrl.u32 %v1300, 7
        %v1302 = vsub.s32 %v1299, %v1301
        %v1303 = vrot.slane %v1275, %v1302
        %v1304 = vcombine.high %v1282, %v1282
        %v1305 = vcombine.high %v1289, %v1289
        %v1306 = vcombine.high %v1296, %v1296
        %v1307 = vcombine.high %v1205, %v1205
        %v1309 = vunpack.c.l.s4 1966171168
        %v1310 = vunpack.c.0.s8 %v1309
        %v1311 = vlaneseq
        %v1312 = vshrl.u32 %v1311, 7
        %v1313 = vsub.s32 %v1310, %v1312
        %v1314 = vrot.slane %v1205, %v1313
        %v1316 = vunpack.c.l.s4 1966171168
        %v1317 = vunpack.c.0.s8 %v1316
        %v1318 = vlaneseq
        %v1319 = vshrl.u32 %v1318, 7
        %v1320 = vsub.s32 %v1317, %v1319
        %v1321 = vrot.slane %v1307, %v1320
        %v1322 = vcombine.high %v1314, %v1314
        %v1323 = vcombine.high %v1321, %v1321
        %v1325 = vunpack.c.l.s4 1966171168
        %v1326 = vunpack.c.0.s8 %v1325
        %v1327 = vlaneseq
        %v1328 = vshrl.u32 %v1327, 7
        %v1329 = vsub.s32 %v1326, %v1328
        %v1330 = vrot.slane %v1314, %v1329
        %v1332 = vunpack.c.l.s4 1966171168
        %v1333 = vunpack.c.0.s8 %v1332
        %v1334 = vlaneseq
        %v1335 = vshrl.u32 %v1334, 7
        %v1336 = vsub.s32 %v1333, %v1335
        %v1337 = vrot.slane %v1321, %v1336
        %v1339 = vunpack.c.l.s4 1966171168
        %v1340 = vunpack.c.0.s8 %v1339
        %v1341 = vlaneseq
        %v1342 = vshrl.u32 %v1341, 7
        %v1343 = vsub.s32 %v1340, %v1342
        %v1344 = vrot.slane %v1322, %v1343
        %v1346 = vunpack.c.l.s4 1966171168
        %v1347 = vunpack.c.0.s8 %v1346
        %v1348 = vlaneseq
        %v1349 = vshrl.u32 %v1348, 7
        %v1350 = vsub.s32 %v1347, %v1349
        %v1351 = vrot.slane %v1323, %v1350
        %v1352 = vcombine.high %v1330, %v1330
        %v1353 = vcombine.high %v1337, %v1337
        %v1354 = vcombine.high %v1344, %v1344
        %v1355 = vcombine.high %v1206, %v1206
        %v1357 = vunpack.c.l.s4 1966171168
        %v1358 = vunpack.c.0.s8 %v1357
        %v1359 = vlaneseq
        %v1360 = vshrl.u32 %v1359, 7
        %v1361 = vsub.s32 %v1358, %v1360
        %v1362 = vrot.slane %v1206, %v1361
        %v1364 = vunpack.c.l.s4 1966171168
        %v1365 = vunpack.c.0.s8 %v1364
        %v1366 = vlaneseq
        %v1367 = vshrl.u32 %v1366, 7
        %v1368 = vsub.s32 %v1365, %v1367
        %v1369 = vrot.slane %v1355, %v1368
        %v1370 = vcombine.high %v1362, %v1362
        %v1371 = vcombine.high %v1369, %v1369
        %v1373 = vunpack.c.l.s4 1966171168
        %v1374 = vunpack.c.0.s8 %v1373
        %v1375 = vlaneseq
        %v1376 = vshrl.u32 %v1375, 7
        %v1377 = vsub.s32 %v1374, %v1376
        %v1378 = vrot.slane %v1362, %v1377
        %v1380 = vunpack.c.l.s4 1966171168
        %v1381 = vunpack.c.0.s8 %v1380
        %v1382 = vlaneseq
        %v1383 = vshrl.u32 %v1382, 7
        %v1384 = vsub.s32 %v1381, %v1383
        %v1385 = vrot.slane %v1369, %v1384
        %v1387 = vunpack.c.l.s4 1966171168
        %v1388 = vunpack.c.0.s8 %v1387
        %v1389 = vlaneseq
        %v1390 = vshrl.u32 %v1389, 7
        %v1391 = vsub.s32 %v1388, %v1390
        %v1392 = vrot.slane %v1370, %v1391
        %v1394 = vunpack.c.l.s4 1966171168
        %v1395 = vunpack.c.0.s8 %v1394
        %v1396 = vlaneseq
        %v1397 = vshrl.u32 %v1396, 7
        %v1398 = vsub.s32 %v1395, %v1397
        %v1399 = vrot.slane %v1371, %v1398
        %v1400 = vcombine.high %v1378, %v1378
        %v1401 = vcombine.high %v1385, %v1385
        %v1402 = vcombine.high %v1392, %v1392
        %v1403 = vcombine.low %v1234, %v1248
        %v1404 = vcombine.low %v1256, %v1258
        %v1405 = vcombine.low %v1241, %v1255
        %v1406 = vcombine.low %v1257, %v1282
        %v1408 = vunpack.c.l.s4 1966171168
        %v1409 = vunpack.c.0.s8 %v1408
        %v1410 = vlaneseq
        %v1411 = vshrl.u32 %v1410, 7
        %v1412 = vsub.s32 %v1409, %v1411
        %v1413 = vrot.slane %v1403, %v1412
        %v1415 = vunpack.c.l.s4 1966171168
        %v1416 = vunpack.c.0.s8 %v1415
        %v1417 = vlaneseq
        %v1418 = vshrl.u32 %v1417, 7
        %v1419 = vsub.s32 %v1416, %v1418
        %v1420 = vrot.slane %v1404, %v1419
        %v1422 = vunpack.c.l.s4 1966171168
        %v1423 = vunpack.c.0.s8 %v1422
        %v1424 = vlaneseq
        %v1425 = vshrl.u32 %v1424, 7
        %v1426 = vsub.s32 %v1423, %v1425
        %v1427 = vrot.slane %v1405, %v1426
        %v1429 = vunpack.c.l.s4 1966171168
        %v1430 = vunpack.c.0.s8 %v1429
        %v1431 = vlaneseq
        %v1432 = vshrl.u32 %v1431, 7
        %v1433 = vsub.s32 %v1430, %v1432
        %v1434 = vrot.slane %v1406, %v1433
        %v1435 = vcombine.low %v1413, %v1420
        %v1436 = vcombine.low %v1427, %v1434
        %v1438 = vunpack.c.l.s4 1966171168
        %v1439 = vunpack.c.0.s8 %v1438
        %v1440 = vlaneseq
        %v1441 = vshrl.u32 %v1440, 7
        %v1442 = vsub.s32 %v1439, %v1441
        %v1443 = vrot.slane %v1435, %v1442
        %v1445 = vunpack.c.l.s4 1966171168
        %v1446 = vunpack.c.0.s8 %v1445
        %v1447 = vlaneseq
        %v1448 = vshrl.u32 %v1447, 7
        %v1449 = vsub.s32 %v1446, %v1448
        %v1450 = vrot.slane %v1436, %v1449
        %v1451 = vcombine.low %v1443, %v1450
        %v1452 = vcombine.low %v1296, %v1304
        %v1453 = vcombine.low %v1306, %v1289
        %v1454 = vcombine.low %v1303, %v1305
        %v1455 = vcombine.low %v1330, %v1344
        %v1457 = vunpack.c.l.s4 1966171168
        %v1458 = vunpack.c.0.s8 %v1457
        %v1459 = vlaneseq
        %v1460 = vshrl.u32 %v1459, 7
        %v1461 = vsub.s32 %v1458, %v1460
        %v1462 = vrot.slane %v1452, %v1461
        %v1464 = vunpack.c.l.s4 1966171168
        %v1465 = vunpack.c.0.s8 %v1464
        %v1466 = vlaneseq
        %v1467 = vshrl.u32 %v1466, 7
        %v1468 = vsub.s32 %v1465, %v1467
        %v1469 = vrot.slane %v1453, %v1468
        %v1471 = vunpack.c.l.s4 1966171168
        %v1472 = vunpack.c.0.s8 %v1471
        %v1473 = vlaneseq
        %v1474 = vshrl.u32 %v1473, 7
        %v1475 = vsub.s32 %v1472, %v1474
        %v1476 = vrot.slane %v1454, %v1475
        %v1478 = vunpack.c.l.s4 1966171168
        %v1479 = vunpack.c.0.s8 %v1478
        %v1480 = vlaneseq
        %v1481 = vshrl.u32 %v1480, 7
        %v1482 = vsub.s32 %v1479, %v1481
        %v1483 = vrot.slane %v1455, %v1482
        %v1484 = vcombine.low %v1462, %v1469
        %v1485 = vcombine.low %v1476, %v1483
        %v1487 = vunpack.c.l.s4 1966171168
        %v1488 = vunpack.c.0.s8 %v1487
        %v1489 = vlaneseq
        %v1490 = vshrl.u32 %v1489, 7
        %v1491 = vsub.s32 %v1488, %v1490
        %v1492 = vrot.slane %v1484, %v1491
        %v1494 = vunpack.c.l.s4 1966171168
        %v1495 = vunpack.c.0.s8 %v1494
        %v1496 = vlaneseq
        %v1497 = vshrl.u32 %v1496, 7
        %v1498 = vsub.s32 %v1495, %v1497
        %v1499 = vrot.slane %v1485, %v1498
        %v1500 = vcombine.low %v1492, %v1499
        %v1501 = vcombine.low %v1352, %v1354
        %v1502 = vcombine.low %v1337, %v1351
        %v1503 = vcombine.low %v1353, %v1378
        %v1504 = vcombine.low %v1392, %v1400
        %v1506 = vunpack.c.l.s4 1966171168
        %v1507 = vunpack.c.0.s8 %v1506
        %v1508 = vlaneseq
        %v1509 = vshrl.u32 %v1508, 7
        %v1510 = vsub.s32 %v1507, %v1509
        %v1511 = vrot.slane %v1501, %v1510
        %v1513 = vunpack.c.l.s4 1966171168
        %v1514 = vunpack.c.0.s8 %v1513
        %v1515 = vlaneseq
        %v1516 = vshrl.u32 %v1515, 7
        %v1517 = vsub.s32 %v1514, %v1516
        %v1518 = vrot.slane %v1502, %v1517
        %v1520 = vunpack.c.l.s4 1966171168
        %v1521 = vunpack.c.0.s8 %v1520
        %v1522 = vlaneseq
        %v1523 = vshrl.u32 %v1522, 7
        %v1524 = vsub.s32 %v1521, %v1523
        %v1525 = vrot.slane %v1503, %v1524
        %v1527 = vunpack.c.l.s4 1966171168
        %v1528 = vunpack.c.0.s8 %v1527
        %v1529 = vlaneseq
        %v1530 = vshrl.u32 %v1529, 7
        %v1531 = vsub.s32 %v1528, %v1530
        %v1532 = vrot.slane %v1504, %v1531
        %v1533 = vcombine.low %v1511, %v1518
        %v1534 = vcombine.low %v1525, %v1532
        %v1536 = vunpack.c.l.s4 1966171168
        %v1537 = vunpack.c.0.s8 %v1536
        %v1538 = vlaneseq
        %v1539 = vshrl.u32 %v1538, 7
        %v1540 = vsub.s32 %v1537, %v1539
        %v1541 = vrot.slane %v1533, %v1540
        %v1543 = vunpack.c.l.s4 1966171168
        %v1544 = vunpack.c.0.s8 %v1543
        %v1545 = vlaneseq
        %v1546 = vshrl.u32 %v1545, 7
        %v1547 = vsub.s32 %v1544, %v1546
        %v1548 = vrot.slane %v1534, %v1547
        %v1549 = vcombine.low %v1541, %v1548
        %v1550 = vcombine.low %v1402, %v1385
        %v1551 = vcombine.low %v1399, %v1401
        %v1553 = vunpack.c.l.s4 1966171168
        %v1554 = vunpack.c.0.s8 %v1553
        %v1555 = vlaneseq
        %v1556 = vshrl.u32 %v1555, 7
        %v1557 = vsub.s32 %v1554, %v1556
        %v1558 = vrot.slane %v1550, %v1557
        %v1560 = vunpack.c.l.s4 1966171168
        %v1561 = vunpack.c.0.s8 %v1560
        %v1562 = vlaneseq
        %v1563 = vshrl.u32 %v1562, 7
        %v1564 = vsub.s32 %v1561, %v1563
        %v1565 = vrot.slane %v1551, %v1564
        %v1566 = vcombine.low %v1558, %v1565
        %v1568 = vunpack.c.l.s4 1966171168
        %v1569 = vunpack.c.0.s8 %v1568
        %v1570 = vlaneseq
        %v1571 = vshrl.u32 %v1570, 7
        %v1572 = vsub.s32 %v1569, %v1571
        %v1573 = vrot.slane %v1566, %v1572
        %v1578 = vpack.c.bf16 %v1500, %v1451
        %v1579 = vpack.c.bf16 %v1573, %v1549
        %v1580 = vld [vmem:[%s3] sm:$0xf]
        %v1581 = vld [vmem:[%s3 + $0x4] sm:$0xf]
        %v1582 = vld [vmem:[%s3 + $0x8] sm:$0xf]
        %v1583 = vld [vmem:[#allocation2] sm:$0x1]
        %v1585 = vlaneseq
        %v1586 = vshrl.u32 %v1585, 7
        %v1587 = vsub.s32 0, %v1586
        %v1588 = vrot.slane %v1583, %v1587
        %v1593 = vunpack.c.l.b16 %v1580
        %v1594 = vunpack.c.l.b16 %v1581
        %v1595 = vunpack.c.l.b16 %v1582
        %v1596 = vpack.c.b16 %v1594, %v1593
        %v1597 = vpack.c.b16 %v1595, %v1595
        %vm1599 = vcmask 195584
        %v1601 = vsel %vm1599, %v1578, 0
        %v1604 = vsel %vm1599, %v1579, 0
        %vm1606 = vcmask 1043456
        %v1608 = vsel %vm1606, %v1597, 0
        %1610 = vmatprep.subr.bf16.mxu0 0
        %1611 = vmatpush1.bf16.msra.mxu0 0
        %1612 = vmatprep.subr.bf16.mxu0 0
        %1613 = vmatpush1.bf16.msra.mxu0 0
        %1614 = vmatprep.subr.bf16.mxu0 0
        %1615 = vmatpush1.bf16.msra.mxu0 0
        %1616 = vmatprep.subr.bf16.mxu0 0
        %1617 = vmatpush1.bf16.msra.mxu0 0
        %1618 = vmatprep.subr.bf16.mxu0 0
        %1619 = vmatpush1.bf16.msra.mxu0 0
        %1620 = vmatprep.subr.bf16.mxu0 0
        %1621 = vmatpush1.bf16.msra.mxu0 0
        %1622 = vmatprep.subr.bf16.mxu0 0
        %1623 = vmatpush1.bf16.msra.mxu0 %v1608
        %1624 = vmatprep.subr.bf16.mxu0 0
        %1625 = vmatpush1.bf16.msra.mxu0 %v1596
        %1626 = vmatprep.subr.bf16.mxu0 0
        %1627 = vmatpush2.bf16.msra.mxu0 0
        %1628 = vmatprep.subr.bf16.mxu0 0
        %1629 = vmatpush2.bf16.msra.mxu0 0
        %1630 = vmatprep.subr.bf16.mxu0 0
        %1631 = vmatpush2.bf16.msra.mxu0 0
        %1632 = vmatprep.subr.bf16.mxu0 0
        %1633 = vmatpush2.bf16.msra.mxu0 0
        %1634 = vmatprep.subr.bf16.mxu0 0
        %1635 = vmatpush2.bf16.msra.mxu0 0
        %1636 = vmatprep.subr.bf16.mxu0 0
        %1637 = vmatpush2.bf16.msra.mxu0 0
        %1638 = vmatprep.subr.bf16.mxu0 0
        %1639 = vmatpush2.bf16.msra.mxu0 0
        %1640 = vmatprep.subr.bf16.mxu0 0
        %1641 = vmatpush2.bf16.msra.mxu0 0
        %1642 = vmatprep.mubr.bf16.mxu0 0
        %1643 = vmatmul.mubr.bf16.gmra.mxu0 %v1601
        %v1644 = vpop.f32.mrf.mxu0
        %v1645 = vadd.f32 %v1588, %v1644
        %v1646 = vpop.f32.mrf.mxu0
        %v1647 = vpop.f32.mrf.mxu0
        %v1648 = vadd.f32 %v1588, %v1647
        %v1649 = vpop.f32.mrf.mxu0
        %1650 = vmatprep.mubr.bf16.mxu0 0
        %1651 = vmatmul.mubr.bf16.gmra.mxu0 %v1604
        %v1652 = vpop.f32.mrf.mxu0
        %v1653 = vadd.f32 %v1588, %v1652
        %v1654 = vpop.f32.mrf.mxu0
        %v1655 = vpop.f32.mrf.mxu0
        %v1656 = vadd.f32 %v1588, %v1655
        %v1657 = vpop.f32.mrf.mxu0
        %1658 = vdwg.mxu0
        %v1659 = vmax.f32 %v1645, 0.0
        %v1660 = vmax.f32 %v1648, 0.0
        %v1661 = vmax.f32 %v1653, 0.0
        %v1662 = vmax.f32 %v1656, 0.0
        %v1667 = vcombine.high %v1659, %v1659
        %v1669 = vunpack.c.l.s4 1966171168
        %v1670 = vunpack.c.0.s8 %v1669
        %v1671 = vlaneseq
        %v1672 = vshrl.u32 %v1671, 7
        %v1673 = vsub.s32 %v1670, %v1672
        %v1674 = vrot.slane %v1659, %v1673
        %v1676 = vunpack.c.l.s4 1966171168
        %v1677 = vunpack.c.0.s8 %v1676
        %v1678 = vlaneseq
        %v1679 = vshrl.u32 %v1678, 7
        %v1680 = vsub.s32 %v1677, %v1679
        %v1681 = vrot.slane %v1667, %v1680
        %v1682 = vcombine.high %v1674, %v1674
        %v1683 = vcombine.high %v1681, %v1681
        %v1685 = vunpack.c.l.s4 1966171168
        %v1686 = vunpack.c.0.s8 %v1685
        %v1687 = vlaneseq
        %v1688 = vshrl.u32 %v1687, 7
        %v1689 = vsub.s32 %v1686, %v1688
        %v1690 = vrot.slane %v1674, %v1689
        %v1692 = vunpack.c.l.s4 1966171168
        %v1693 = vunpack.c.0.s8 %v1692
        %v1694 = vlaneseq
        %v1695 = vshrl.u32 %v1694, 7
        %v1696 = vsub.s32 %v1693, %v1695
        %v1697 = vrot.slane %v1681, %v1696
        %v1699 = vunpack.c.l.s4 1966171168
        %v1700 = vunpack.c.0.s8 %v1699
        %v1701 = vlaneseq
        %v1702 = vshrl.u32 %v1701, 7
        %v1703 = vsub.s32 %v1700, %v1702
        %v1704 = vrot.slane %v1682, %v1703
        %v1706 = vunpack.c.l.s4 1966171168
        %v1707 = vunpack.c.0.s8 %v1706
        %v1708 = vlaneseq
        %v1709 = vshrl.u32 %v1708, 7
        %v1710 = vsub.s32 %v1707, %v1709
        %v1711 = vrot.slane %v1683, %v1710
        %v1712 = vcombine.high %v1690, %v1690
        %v1713 = vcombine.high %v1697, %v1697
        %v1714 = vcombine.high %v1704, %v1704
        %v1715 = vcombine.high %v1711, %v1711
        %v1716 = vcombine.high %v1660, %v1660
        %v1718 = vunpack.c.l.s4 1966171168
        %v1719 = vunpack.c.0.s8 %v1718
        %v1720 = vlaneseq
        %v1721 = vshrl.u32 %v1720, 7
        %v1722 = vsub.s32 %v1719, %v1721
        %v1723 = vrot.slane %v1660, %v1722
        %v1725 = vunpack.c.l.s4 1966171168
        %v1726 = vunpack.c.0.s8 %v1725
        %v1727 = vlaneseq
        %v1728 = vshrl.u32 %v1727, 7
        %v1729 = vsub.s32 %v1726, %v1728
        %v1730 = vrot.slane %v1716, %v1729
        %v1731 = vcombine.high %v1723, %v1723
        %v1732 = vcombine.high %v1730, %v1730
        %v1734 = vunpack.c.l.s4 1966171168
        %v1735 = vunpack.c.0.s8 %v1734
        %v1736 = vlaneseq
        %v1737 = vshrl.u32 %v1736, 7
        %v1738 = vsub.s32 %v1735, %v1737
        %v1739 = vrot.slane %v1723, %v1738
        %v1741 = vunpack.c.l.s4 1966171168
        %v1742 = vunpack.c.0.s8 %v1741
        %v1743 = vlaneseq
        %v1744 = vshrl.u32 %v1743, 7
        %v1745 = vsub.s32 %v1742, %v1744
        %v1746 = vrot.slane %v1730, %v1745
        %v1748 = vunpack.c.l.s4 1966171168
        %v1749 = vunpack.c.0.s8 %v1748
        %v1750 = vlaneseq
        %v1751 = vshrl.u32 %v1750, 7
        %v1752 = vsub.s32 %v1749, %v1751
        %v1753 = vrot.slane %v1731, %v1752
        %v1755 = vunpack.c.l.s4 1966171168
        %v1756 = vunpack.c.0.s8 %v1755
        %v1757 = vlaneseq
        %v1758 = vshrl.u32 %v1757, 7
        %v1759 = vsub.s32 %v1756, %v1758
        %v1760 = vrot.slane %v1732, %v1759
        %v1761 = vcombine.high %v1739, %v1739
        %v1762 = vcombine.high %v1746, %v1746
        %v1763 = vcombine.high %v1753, %v1753
        %v1764 = vcombine.high %v1760, %v1760
        %v1765 = vcombine.high %v1661, %v1661
        %v1767 = vunpack.c.l.s4 1966171168
        %v1768 = vunpack.c.0.s8 %v1767
        %v1769 = vlaneseq
        %v1770 = vshrl.u32 %v1769, 7
        %v1771 = vsub.s32 %v1768, %v1770
        %v1772 = vrot.slane %v1661, %v1771
        %v1774 = vunpack.c.l.s4 1966171168
        %v1775 = vunpack.c.0.s8 %v1774
        %v1776 = vlaneseq
        %v1777 = vshrl.u32 %v1776, 7
        %v1778 = vsub.s32 %v1775, %v1777
        %v1779 = vrot.slane %v1765, %v1778
        %v1780 = vcombine.high %v1772, %v1772
        %v1781 = vcombine.high %v1779, %v1779
        %v1783 = vunpack.c.l.s4 1966171168
        %v1784 = vunpack.c.0.s8 %v1783
        %v1785 = vlaneseq
        %v1786 = vshrl.u32 %v1785, 7
        %v1787 = vsub.s32 %v1784, %v1786
        %v1788 = vrot.slane %v1772, %v1787
        %v1790 = vunpack.c.l.s4 1966171168
        %v1791 = vunpack.c.0.s8 %v1790
        %v1792 = vlaneseq
        %v1793 = vshrl.u32 %v1792, 7
        %v1794 = vsub.s32 %v1791, %v1793
        %v1795 = vrot.slane %v1779, %v1794
        %v1797 = vunpack.c.l.s4 1966171168
        %v1798 = vunpack.c.0.s8 %v1797
        %v1799 = vlaneseq
        %v1800 = vshrl.u32 %v1799, 7
        %v1801 = vsub.s32 %v1798, %v1800
        %v1802 = vrot.slane %v1780, %v1801
        %v1804 = vunpack.c.l.s4 1966171168
        %v1805 = vunpack.c.0.s8 %v1804
        %v1806 = vlaneseq
        %v1807 = vshrl.u32 %v1806, 7
        %v1808 = vsub.s32 %v1805, %v1807
        %v1809 = vrot.slane %v1781, %v1808
        %v1810 = vcombine.high %v1788, %v1788
        %v1811 = vcombine.high %v1795, %v1795
        %v1812 = vcombine.high %v1802, %v1802
        %v1813 = vcombine.high %v1809, %v1809
        %v1815 = vunpack.c.l.s4 1966171168
        %v1816 = vunpack.c.0.s8 %v1815
        %v1817 = vlaneseq
        %v1818 = vshrl.u32 %v1817, 7
        %v1819 = vsub.s32 %v1816, %v1818
        %v1820 = vrot.slane %v1662, %v1819
        %v1821 = vcombine.high %v1820, %v1820
        %v1823 = vunpack.c.l.s4 1966171168
        %v1824 = vunpack.c.0.s8 %v1823
        %v1825 = vlaneseq
        %v1826 = vshrl.u32 %v1825, 7
        %v1827 = vsub.s32 %v1824, %v1826
        %v1828 = vrot.slane %v1820, %v1827
        %v1830 = vunpack.c.l.s4 1966171168
        %v1831 = vunpack.c.0.s8 %v1830
        %v1832 = vlaneseq
        %v1833 = vshrl.u32 %v1832, 7
        %v1834 = vsub.s32 %v1831, %v1833
        %v1835 = vrot.slane %v1821, %v1834
        %v1836 = vcombine.high %v1828, %v1828
        %v1837 = vcombine.high %v1835, %v1835
        %v1838 = vcombine.low %v1690, %v1690
        %v1839 = vcombine.low %v1704, %v1712
        %v1840 = vcombine.low %v1714, %v1697
        %v1841 = vcombine.low %v1711, %v1713
        %v1843 = vunpack.c.l.s4 1966171168
        %v1844 = vunpack.c.0.s8 %v1843
        %v1845 = vlaneseq
        %v1846 = vshrl.u32 %v1845, 7
        %v1847 = vsub.s32 %v1844, %v1846
        %v1848 = vrot.slane %v1838, %v1847
        %v1850 = vunpack.c.l.s4 1966171168
        %v1851 = vunpack.c.0.s8 %v1850
        %v1852 = vlaneseq
        %v1853 = vshrl.u32 %v1852, 7
        %v1854 = vsub.s32 %v1851, %v1853
        %v1855 = vrot.slane %v1839, %v1854
        %v1857 = vunpack.c.l.s4 1966171168
        %v1858 = vunpack.c.0.s8 %v1857
        %v1859 = vlaneseq
        %v1860 = vshrl.u32 %v1859, 7
        %v1861 = vsub.s32 %v1858, %v1860
        %v1862 = vrot.slane %v1840, %v1861
        %v1864 = vunpack.c.l.s4 1966171168
        %v1865 = vunpack.c.0.s8 %v1864
        %v1866 = vlaneseq
        %v1867 = vshrl.u32 %v1866, 7
        %v1868 = vsub.s32 %v1865, %v1867
        %v1869 = vrot.slane %v1841, %v1868
        %v1870 = vcombine.low %v1848, %v1855
        %v1871 = vcombine.low %v1862, %v1869
        %v1873 = vunpack.c.l.s4 1966171168
        %v1874 = vunpack.c.0.s8 %v1873
        %v1875 = vlaneseq
        %v1876 = vshrl.u32 %v1875, 7
        %v1877 = vsub.s32 %v1874, %v1876
        %v1878 = vrot.slane %v1870, %v1877
        %v1880 = vunpack.c.l.s4 1966171168
        %v1881 = vunpack.c.0.s8 %v1880
        %v1882 = vlaneseq
        %v1883 = vshrl.u32 %v1882, 7
        %v1884 = vsub.s32 %v1881, %v1883
        %v1885 = vrot.slane %v1871, %v1884
        %v1886 = vcombine.low %v1878, %v1885
        %v1887 = vcombine.low %v1715, %v1715
        %v1888 = vcombine.low %v1739, %v1753
        %v1889 = vcombine.low %v1761, %v1763
        %v1890 = vcombine.low %v1746, %v1760
        %v1892 = vunpack.c.l.s4 1966171168
        %v1893 = vunpack.c.0.s8 %v1892
        %v1894 = vlaneseq
        %v1895 = vshrl.u32 %v1894, 7
        %v1896 = vsub.s32 %v1893, %v1895
        %v1897 = vrot.slane %v1887, %v1896
        %v1899 = vunpack.c.l.s4 1966171168
        %v1900 = vunpack.c.0.s8 %v1899
        %v1901 = vlaneseq
        %v1902 = vshrl.u32 %v1901, 7
        %v1903 = vsub.s32 %v1900, %v1902
        %v1904 = vrot.slane %v1888, %v1903
        %v1906 = vunpack.c.l.s4 1966171168
        %v1907 = vunpack.c.0.s8 %v1906
        %v1908 = vlaneseq
        %v1909 = vshrl.u32 %v1908, 7
        %v1910 = vsub.s32 %v1907, %v1909
        %v1911 = vrot.slane %v1889, %v1910
        %v1913 = vunpack.c.l.s4 1966171168
        %v1914 = vunpack.c.0.s8 %v1913
        %v1915 = vlaneseq
        %v1916 = vshrl.u32 %v1915, 7
        %v1917 = vsub.s32 %v1914, %v1916
        %v1918 = vrot.slane %v1890, %v1917
        %v1919 = vcombine.low %v1897, %v1904
        %v1920 = vcombine.low %v1911, %v1918
        %v1922 = vunpack.c.l.s4 1966171168
        %v1923 = vunpack.c.0.s8 %v1922
        %v1924 = vlaneseq
        %v1925 = vshrl.u32 %v1924, 7
        %v1926 = vsub.s32 %v1923, %v1925
        %v1927 = vrot.slane %v1919, %v1926
        %v1929 = vunpack.c.l.s4 1966171168
        %v1930 = vunpack.c.0.s8 %v1929
        %v1931 = vlaneseq
        %v1932 = vshrl.u32 %v1931, 7
        %v1933 = vsub.s32 %v1930, %v1932
        %v1934 = vrot.slane %v1920, %v1933
        %v1935 = vcombine.low %v1927, %v1934
        %v1936 = vcombine.low %v1762, %v1762
        %v1937 = vcombine.low %v1764, %v1788
        %v1938 = vcombine.low %v1802, %v1810
        %v1939 = vcombine.low %v1812, %v1795
        %v1941 = vunpack.c.l.s4 1966171168
        %v1942 = vunpack.c.0.s8 %v1941
        %v1943 = vlaneseq
        %v1944 = vshrl.u32 %v1943, 7
        %v1945 = vsub.s32 %v1942, %v1944
        %v1946 = vrot.slane %v1936, %v1945
        %v1948 = vunpack.c.l.s4 1966171168
        %v1949 = vunpack.c.0.s8 %v1948
        %v1950 = vlaneseq
        %v1951 = vshrl.u32 %v1950, 7
        %v1952 = vsub.s32 %v1949, %v1951
        %v1953 = vrot.slane %v1937, %v1952
        %v1955 = vunpack.c.l.s4 1966171168
        %v1956 = vunpack.c.0.s8 %v1955
        %v1957 = vlaneseq
        %v1958 = vshrl.u32 %v1957, 7
        %v1959 = vsub.s32 %v1956, %v1958
        %v1960 = vrot.slane %v1938, %v1959
        %v1962 = vunpack.c.l.s4 1966171168
        %v1963 = vunpack.c.0.s8 %v1962
        %v1964 = vlaneseq
        %v1965 = vshrl.u32 %v1964, 7
        %v1966 = vsub.s32 %v1963, %v1965
        %v1967 = vrot.slane %v1939, %v1966
        %v1968 = vcombine.low %v1946, %v1953
        %v1969 = vcombine.low %v1960, %v1967
        %v1971 = vunpack.c.l.s4 1966171168
        %v1972 = vunpack.c.0.s8 %v1971
        %v1973 = vlaneseq
        %v1974 = vshrl.u32 %v1973, 7
        %v1975 = vsub.s32 %v1972, %v1974
        %v1976 = vrot.slane %v1968, %v1975
        %v1978 = vunpack.c.l.s4 1966171168
        %v1979 = vunpack.c.0.s8 %v1978
        %v1980 = vlaneseq
        %v1981 = vshrl.u32 %v1980, 7
        %v1982 = vsub.s32 %v1979, %v1981
        %v1983 = vrot.slane %v1969, %v1982
        %v1984 = vcombine.low %v1976, %v1983
        %v1985 = vcombine.low %v1809, %v1809
        %v1986 = vcombine.low %v1811, %v1813
        %v1987 = vcombine.low %v1828, %v1835
        %v1988 = vcombine.low %v1836, %v1837
        %v1990 = vunpack.c.l.s4 1966171168
        %v1991 = vunpack.c.0.s8 %v1990
        %v1992 = vlaneseq
        %v1993 = vshrl.u32 %v1992, 7
        %v1994 = vsub.s32 %v1991, %v1993
        %v1995 = vrot.slane %v1985, %v1994
        %v1997 = vunpack.c.l.s4 1966171168
        %v1998 = vunpack.c.0.s8 %v1997
        %v1999 = vlaneseq
        %v2000 = vshrl.u32 %v1999, 7
        %v2001 = vsub.s32 %v1998, %v2000
        %v2002 = vrot.slane %v1986, %v2001
        %v2004 = vunpack.c.l.s4 1966171168
        %v2005 = vunpack.c.0.s8 %v2004
        %v2006 = vlaneseq
        %v2007 = vshrl.u32 %v2006, 7
        %v2008 = vsub.s32 %v2005, %v2007
        %v2009 = vrot.slane %v1987, %v2008
        %v2011 = vunpack.c.l.s4 1966171168
        %v2012 = vunpack.c.0.s8 %v2011
        %v2013 = vlaneseq
        %v2014 = vshrl.u32 %v2013, 7
        %v2015 = vsub.s32 %v2012, %v2014
        %v2016 = vrot.slane %v1988, %v2015
        %v2017 = vcombine.low %v1995, %v2002
        %v2018 = vcombine.low %v2009, %v2016
        %v2020 = vunpack.c.l.s4 1966171168
        %v2021 = vunpack.c.0.s8 %v2020
        %v2022 = vlaneseq
        %v2023 = vshrl.u32 %v2022, 7
        %v2024 = vsub.s32 %v2021, %v2023
        %v2025 = vrot.slane %v2017, %v2024
        %v2027 = vunpack.c.l.s4 1966171168
        %v2028 = vunpack.c.0.s8 %v2027
        %v2029 = vlaneseq
        %v2030 = vshrl.u32 %v2029, 7
        %v2031 = vsub.s32 %v2028, %v2030
        %v2032 = vrot.slane %v2018, %v2031
        %v2033 = vcombine.low %v2025, %v2032
        %v2038 = vsel %vm1151, 0.0, %v1886
        %v2039 = vsel %vm1151, 0.0, %v1935
        %v2040 = vsel %vm1151, 0.0, %v1984
        %v2041 = vsel %vm1151, 0.0, %v2033
        %v2046 = vrot.slane %v2038, 1
        %v2047 = vrot.slane %v2039, 1
        %v2048 = vrot.slane %v2040, 1
        %v2049 = vrot.slane %v2041, 1
        %2050 = vrot.lane.b32.xlu0 %v2046, 16
        %v2051 = vpop.permute.xlu0 %2050
        %2052 = vrot.lane.b32.xlu0 %v2047, 16
        %v2053 = vpop.permute.xlu0 %2052
        %2054 = vrot.lane.b32.xlu0 %v2048, 16
        %v2055 = vpop.permute.xlu0 %2054
        %2056 = vrot.lane.b32.xlu0 %v2049, 16
        %v2057 = vpop.permute.xlu0 %2056
        %v2062 = vrot.slane %v2038, 2
        %v2063 = vsel %vm719, %v2062, %v1178
        %v2064 = vrot.slane %v2039, 2
        %v2065 = vsel %vm719, %v2064, %v1178
        %v2066 = vrot.slane %v2040, 2
        %v2067 = vsel %vm719, %v2066, %v1178
        %v2068 = vrot.slane %v2041, 2
        %v2069 = vsel %vm719, %v2068, %v1178
        %2070 = vrot.lane.b32.xlu0 %v2063, 32
        %v2071 = vpop.permute.xlu0 %2070
        %2072 = vrot.lane.b32.xlu0 %v2065, 32
        %v2073 = vpop.permute.xlu0 %2072
        %2074 = vrot.lane.b32.xlu0 %v2067, 32
        %v2075 = vpop.permute.xlu0 %2074
        %2076 = vrot.lane.b32.xlu0 %v2069, 32
        %v2077 = vpop.permute.xlu0 %2076
        %v2082 = vsel %vm1202, %v2038, %v2051
        %v2083 = vsel %vm1202, %v2039, %v2053
        %v2084 = vsel %vm1202, %v2040, %v2055
        %v2085 = vsel %vm1202, %v2041, %v2057
        %vm2086 = vcmask 261120
        %v2087 = vsel %vm2086, %v2082, %v2071
        %v2088 = vsel %vm2086, %v2083, %v2073
        %v2089 = vsel %vm2086, %v2084, %v2075
        %v2090 = vsel %vm2086, %v2085, %v2077
        %v2095 = vcombine.high %v2087, %v2087
        %v2097 = vunpack.c.l.s4 1966171168
        %v2098 = vunpack.c.0.s8 %v2097
        %v2099 = vlaneseq
        %v2100 = vshrl.u32 %v2099, 7
        %v2101 = vsub.s32 %v2098, %v2100
        %v2102 = vrot.slane %v2087, %v2101
        %v2104 = vunpack.c.l.s4 1966171168
        %v2105 = vunpack.c.0.s8 %v2104
        %v2106 = vlaneseq
        %v2107 = vshrl.u32 %v2106, 7
        %v2108 = vsub.s32 %v2105, %v2107
        %v2109 = vrot.slane %v2095, %v2108
        %v2110 = vcombine.high %v2102, %v2102
        %v2111 = vcombine.high %v2109, %v2109
        %v2113 = vunpack.c.l.s4 1966171168
        %v2114 = vunpack.c.0.s8 %v2113
        %v2115 = vlaneseq
        %v2116 = vshrl.u32 %v2115, 7
        %v2117 = vsub.s32 %v2114, %v2116
        %v2118 = vrot.slane %v2102, %v2117
        %v2120 = vunpack.c.l.s4 1966171168
        %v2121 = vunpack.c.0.s8 %v2120
        %v2122 = vlaneseq
        %v2123 = vshrl.u32 %v2122, 7
        %v2124 = vsub.s32 %v2121, %v2123
        %v2125 = vrot.slane %v2109, %v2124
        %v2127 = vunpack.c.l.s4 1966171168
        %v2128 = vunpack.c.0.s8 %v2127
        %v2129 = vlaneseq
        %v2130 = vshrl.u32 %v2129, 7
        %v2131 = vsub.s32 %v2128, %v2130
        %v2132 = vrot.slane %v2110, %v2131
        %v2134 = vunpack.c.l.s4 1966171168
        %v2135 = vunpack.c.0.s8 %v2134
        %v2136 = vlaneseq
        %v2137 = vshrl.u32 %v2136, 7
        %v2138 = vsub.s32 %v2135, %v2137
        %v2139 = vrot.slane %v2111, %v2138
        %v2140 = vcombine.high %v2118, %v2118
        %v2141 = vcombine.high %v2125, %v2125
        %v2142 = vcombine.high %v2132, %v2132
        %v2143 = vcombine.high %v2088, %v2088
        %v2145 = vunpack.c.l.s4 1966171168
        %v2146 = vunpack.c.0.s8 %v2145
        %v2147 = vlaneseq
        %v2148 = vshrl.u32 %v2147, 7
        %v2149 = vsub.s32 %v2146, %v2148
        %v2150 = vrot.slane %v2088, %v2149
        %v2152 = vunpack.c.l.s4 1966171168
        %v2153 = vunpack.c.0.s8 %v2152
        %v2154 = vlaneseq
        %v2155 = vshrl.u32 %v2154, 7
        %v2156 = vsub.s32 %v2153, %v2155
        %v2157 = vrot.slane %v2143, %v2156
        %v2158 = vcombine.high %v2150, %v2150
        %v2159 = vcombine.high %v2157, %v2157
        %v2161 = vunpack.c.l.s4 1966171168
        %v2162 = vunpack.c.0.s8 %v2161
        %v2163 = vlaneseq
        %v2164 = vshrl.u32 %v2163, 7
        %v2165 = vsub.s32 %v2162, %v2164
        %v2166 = vrot.slane %v2150, %v2165
        %v2168 = vunpack.c.l.s4 1966171168
        %v2169 = vunpack.c.0.s8 %v2168
        %v2170 = vlaneseq
        %v2171 = vshrl.u32 %v2170, 7
        %v2172 = vsub.s32 %v2169, %v2171
        %v2173 = vrot.slane %v2157, %v2172
        %v2175 = vunpack.c.l.s4 1966171168
        %v2176 = vunpack.c.0.s8 %v2175
        %v2177 = vlaneseq
        %v2178 = vshrl.u32 %v2177, 7
        %v2179 = vsub.s32 %v2176, %v2178
        %v2180 = vrot.slane %v2158, %v2179
        %v2182 = vunpack.c.l.s4 1966171168
        %v2183 = vunpack.c.0.s8 %v2182
        %v2184 = vlaneseq
        %v2185 = vshrl.u32 %v2184, 7
        %v2186 = vsub.s32 %v2183, %v2185
        %v2187 = vrot.slane %v2159, %v2186
        %v2188 = vcombine.high %v2166, %v2166
        %v2189 = vcombine.high %v2173, %v2173
        %v2190 = vcombine.high %v2180, %v2180
        %v2191 = vcombine.high %v2089, %v2089
        %v2193 = vunpack.c.l.s4 1966171168
        %v2194 = vunpack.c.0.s8 %v2193
        %v2195 = vlaneseq
        %v2196 = vshrl.u32 %v2195, 7
        %v2197 = vsub.s32 %v2194, %v2196
        %v2198 = vrot.slane %v2089, %v2197
        %v2200 = vunpack.c.l.s4 1966171168
        %v2201 = vunpack.c.0.s8 %v2200
        %v2202 = vlaneseq
        %v2203 = vshrl.u32 %v2202, 7
        %v2204 = vsub.s32 %v2201, %v2203
        %v2205 = vrot.slane %v2191, %v2204
        %v2206 = vcombine.high %v2198, %v2198
        %v2207 = vcombine.high %v2205, %v2205
        %v2209 = vunpack.c.l.s4 1966171168
        %v2210 = vunpack.c.0.s8 %v2209
        %v2211 = vlaneseq
        %v2212 = vshrl.u32 %v2211, 7
        %v2213 = vsub.s32 %v2210, %v2212
        %v2214 = vrot.slane %v2198, %v2213
        %v2216 = vunpack.c.l.s4 1966171168
        %v2217 = vunpack.c.0.s8 %v2216
        %v2218 = vlaneseq
        %v2219 = vshrl.u32 %v2218, 7
        %v2220 = vsub.s32 %v2217, %v2219
        %v2221 = vrot.slane %v2205, %v2220
        %v2223 = vunpack.c.l.s4 1966171168
        %v2224 = vunpack.c.0.s8 %v2223
        %v2225 = vlaneseq
        %v2226 = vshrl.u32 %v2225, 7
        %v2227 = vsub.s32 %v2224, %v2226
        %v2228 = vrot.slane %v2206, %v2227
        %v2230 = vunpack.c.l.s4 1966171168
        %v2231 = vunpack.c.0.s8 %v2230
        %v2232 = vlaneseq
        %v2233 = vshrl.u32 %v2232, 7
        %v2234 = vsub.s32 %v2231, %v2233
        %v2235 = vrot.slane %v2207, %v2234
        %v2236 = vcombine.high %v2214, %v2214
        %v2237 = vcombine.high %v2221, %v2221
        %v2238 = vcombine.high %v2228, %v2228
        %v2239 = vcombine.high %v2090, %v2090
        %v2241 = vunpack.c.l.s4 1966171168
        %v2242 = vunpack.c.0.s8 %v2241
        %v2243 = vlaneseq
        %v2244 = vshrl.u32 %v2243, 7
        %v2245 = vsub.s32 %v2242, %v2244
        %v2246 = vrot.slane %v2090, %v2245
        %v2248 = vunpack.c.l.s4 1966171168
        %v2249 = vunpack.c.0.s8 %v2248
        %v2250 = vlaneseq
        %v2251 = vshrl.u32 %v2250, 7
        %v2252 = vsub.s32 %v2249, %v2251
        %v2253 = vrot.slane %v2239, %v2252
        %v2254 = vcombine.high %v2246, %v2246
        %v2255 = vcombine.high %v2253, %v2253
        %v2257 = vunpack.c.l.s4 1966171168
        %v2258 = vunpack.c.0.s8 %v2257
        %v2259 = vlaneseq
        %v2260 = vshrl.u32 %v2259, 7
        %v2261 = vsub.s32 %v2258, %v2260
        %v2262 = vrot.slane %v2246, %v2261
        %v2264 = vunpack.c.l.s4 1966171168
        %v2265 = vunpack.c.0.s8 %v2264
        %v2266 = vlaneseq
        %v2267 = vshrl.u32 %v2266, 7
        %v2268 = vsub.s32 %v2265, %v2267
        %v2269 = vrot.slane %v2253, %v2268
        %v2271 = vunpack.c.l.s4 1966171168
        %v2272 = vunpack.c.0.s8 %v2271
        %v2273 = vlaneseq
        %v2274 = vshrl.u32 %v2273, 7
        %v2275 = vsub.s32 %v2272, %v2274
        %v2276 = vrot.slane %v2254, %v2275
        %v2278 = vunpack.c.l.s4 1966171168
        %v2279 = vunpack.c.0.s8 %v2278
        %v2280 = vlaneseq
        %v2281 = vshrl.u32 %v2280, 7
        %v2282 = vsub.s32 %v2279, %v2281
        %v2283 = vrot.slane %v2255, %v2282
        %v2284 = vcombine.high %v2262, %v2262
        %v2285 = vcombine.high %v2269, %v2269
        %v2286 = vcombine.high %v2276, %v2276
        %v2287 = vcombine.low %v2118, %v2132
        %v2288 = vcombine.low %v2140, %v2142
        %v2289 = vcombine.low %v2125, %v2139
        %v2290 = vcombine.low %v2141, %v2166
        %v2292 = vunpack.c.l.s4 1966171168
        %v2293 = vunpack.c.0.s8 %v2292
        %v2294 = vlaneseq
        %v2295 = vshrl.u32 %v2294, 7
        %v2296 = vsub.s32 %v2293, %v2295
        %v2297 = vrot.slane %v2287, %v2296
        %v2299 = vunpack.c.l.s4 1966171168
        %v2300 = vunpack.c.0.s8 %v2299
        %v2301 = vlaneseq
        %v2302 = vshrl.u32 %v2301, 7
        %v2303 = vsub.s32 %v2300, %v2302
        %v2304 = vrot.slane %v2288, %v2303
        %v2306 = vunpack.c.l.s4 1966171168
        %v2307 = vunpack.c.0.s8 %v2306
        %v2308 = vlaneseq
        %v2309 = vshrl.u32 %v2308, 7
        %v2310 = vsub.s32 %v2307, %v2309
        %v2311 = vrot.slane %v2289, %v2310
        %v2313 = vunpack.c.l.s4 1966171168
        %v2314 = vunpack.c.0.s8 %v2313
        %v2315 = vlaneseq
        %v2316 = vshrl.u32 %v2315, 7
        %v2317 = vsub.s32 %v2314, %v2316
        %v2318 = vrot.slane %v2290, %v2317
        %v2319 = vcombine.low %v2297, %v2304
        %v2320 = vcombine.low %v2311, %v2318
        %v2322 = vunpack.c.l.s4 1966171168
        %v2323 = vunpack.c.0.s8 %v2322
        %v2324 = vlaneseq
        %v2325 = vshrl.u32 %v2324, 7
        %v2326 = vsub.s32 %v2323, %v2325
        %v2327 = vrot.slane %v2319, %v2326
        %v2329 = vunpack.c.l.s4 1966171168
        %v2330 = vunpack.c.0.s8 %v2329
        %v2331 = vlaneseq
        %v2332 = vshrl.u32 %v2331, 7
        %v2333 = vsub.s32 %v2330, %v2332
        %v2334 = vrot.slane %v2320, %v2333
        %v2335 = vcombine.low %v2327, %v2334
        %v2336 = vcombine.low %v2180, %v2188
        %v2337 = vcombine.low %v2190, %v2173
        %v2338 = vcombine.low %v2187, %v2189
        %v2339 = vcombine.low %v2214, %v2228
        %v2341 = vunpack.c.l.s4 1966171168
        %v2342 = vunpack.c.0.s8 %v2341
        %v2343 = vlaneseq
        %v2344 = vshrl.u32 %v2343, 7
        %v2345 = vsub.s32 %v2342, %v2344
        %v2346 = vrot.slane %v2336, %v2345
        %v2348 = vunpack.c.l.s4 1966171168
        %v2349 = vunpack.c.0.s8 %v2348
        %v2350 = vlaneseq
        %v2351 = vshrl.u32 %v2350, 7
        %v2352 = vsub.s32 %v2349, %v2351
        %v2353 = vrot.slane %v2337, %v2352
        %v2355 = vunpack.c.l.s4 1966171168
        %v2356 = vunpack.c.0.s8 %v2355
        %v2357 = vlaneseq
        %v2358 = vshrl.u32 %v2357, 7
        %v2359 = vsub.s32 %v2356, %v2358
        %v2360 = vrot.slane %v2338, %v2359
        %v2362 = vunpack.c.l.s4 1966171168
        %v2363 = vunpack.c.0.s8 %v2362
        %v2364 = vlaneseq
        %v2365 = vshrl.u32 %v2364, 7
        %v2366 = vsub.s32 %v2363, %v2365
        %v2367 = vrot.slane %v2339, %v2366
        %v2368 = vcombine.low %v2346, %v2353
        %v2369 = vcombine.low %v2360, %v2367
        %v2371 = vunpack.c.l.s4 1966171168
        %v2372 = vunpack.c.0.s8 %v2371
        %v2373 = vlaneseq
        %v2374 = vshrl.u32 %v2373, 7
        %v2375 = vsub.s32 %v2372, %v2374
        %v2376 = vrot.slane %v2368, %v2375
        %v2378 = vunpack.c.l.s4 1966171168
        %v2379 = vunpack.c.0.s8 %v2378
        %v2380 = vlaneseq
        %v2381 = vshrl.u32 %v2380, 7
        %v2382 = vsub.s32 %v2379, %v2381
        %v2383 = vrot.slane %v2369, %v2382
        %v2384 = vcombine.low %v2376, %v2383
        %v2385 = vcombine.low %v2236, %v2238
        %v2386 = vcombine.low %v2221, %v2235
        %v2387 = vcombine.low %v2237, %v2262
        %v2388 = vcombine.low %v2276, %v2284
        %v2390 = vunpack.c.l.s4 1966171168
        %v2391 = vunpack.c.0.s8 %v2390
        %v2392 = vlaneseq
        %v2393 = vshrl.u32 %v2392, 7
        %v2394 = vsub.s32 %v2391, %v2393
        %v2395 = vrot.slane %v2385, %v2394
        %v2397 = vunpack.c.l.s4 1966171168
        %v2398 = vunpack.c.0.s8 %v2397
        %v2399 = vlaneseq
        %v2400 = vshrl.u32 %v2399, 7
        %v2401 = vsub.s32 %v2398, %v2400
        %v2402 = vrot.slane %v2386, %v2401
        %v2404 = vunpack.c.l.s4 1966171168
        %v2405 = vunpack.c.0.s8 %v2404
        %v2406 = vlaneseq
        %v2407 = vshrl.u32 %v2406, 7
        %v2408 = vsub.s32 %v2405, %v2407
        %v2409 = vrot.slane %v2387, %v2408
        %v2411 = vunpack.c.l.s4 1966171168
        %v2412 = vunpack.c.0.s8 %v2411
        %v2413 = vlaneseq
        %v2414 = vshrl.u32 %v2413, 7
        %v2415 = vsub.s32 %v2412, %v2414
        %v2416 = vrot.slane %v2388, %v2415
        %v2417 = vcombine.low %v2395, %v2402
        %v2418 = vcombine.low %v2409, %v2416
        %v2420 = vunpack.c.l.s4 1966171168
        %v2421 = vunpack.c.0.s8 %v2420
        %v2422 = vlaneseq
        %v2423 = vshrl.u32 %v2422, 7
        %v2424 = vsub.s32 %v2421, %v2423
        %v2425 = vrot.slane %v2417, %v2424
        %v2427 = vunpack.c.l.s4 1966171168
        %v2428 = vunpack.c.0.s8 %v2427
        %v2429 = vlaneseq
        %v2430 = vshrl.u32 %v2429, 7
        %v2431 = vsub.s32 %v2428, %v2430
        %v2432 = vrot.slane %v2418, %v2431
        %v2433 = vcombine.low %v2425, %v2432
        %v2434 = vcombine.low %v2286, %v2269
        %v2435 = vcombine.low %v2283, %v2285
        %v2437 = vunpack.c.l.s4 1966171168
        %v2438 = vunpack.c.0.s8 %v2437
        %v2439 = vlaneseq
        %v2440 = vshrl.u32 %v2439, 7
        %v2441 = vsub.s32 %v2438, %v2440
        %v2442 = vrot.slane %v2434, %v2441
        %v2444 = vunpack.c.l.s4 1966171168
        %v2445 = vunpack.c.0.s8 %v2444
        %v2446 = vlaneseq
        %v2447 = vshrl.u32 %v2446, 7
        %v2448 = vsub.s32 %v2445, %v2447
        %v2449 = vrot.slane %v2435, %v2448
        %v2450 = vcombine.low %v2442, %v2449
        %v2452 = vunpack.c.l.s4 1966171168
        %v2453 = vunpack.c.0.s8 %v2452
        %v2454 = vlaneseq
        %v2455 = vshrl.u32 %v2454, 7
        %v2456 = vsub.s32 %v2453, %v2455
        %v2457 = vrot.slane %v2450, %v2456
        %v2462 = vpack.c.bf16 %v2384, %v2335
        %v2463 = vpack.c.bf16 %v2457, %v2433
        %v2464 = vld [vmem:[%s5] sm:$0xf]
        %v2465 = vld [vmem:[%s5 + $0x4] sm:$0xf]
        %v2466 = vld [vmem:[%s5 + $0x8] sm:$0xf]
        %v2467 = vld [vmem:[%s5 + $0xc] sm:$0xf]
        %v2468 = vld [vmem:[%s5 + $0x10] sm:$0xf]
        %v2469 = vld [vmem:[%s5 + $0x14] sm:$0xf]
        %v2470 = vld [vmem:[%s6] sm:$0x1]
        %v2472 = vlaneseq
        %v2473 = vshrl.u32 %v2472, 7
        %v2474 = vsub.s32 0, %v2473
        %v2475 = vrot.slane %v2470, %v2474
        %v2483 = vunpack.c.l.b16 %v2464
        %v2484 = vunpack.c.l.b16 %v2465
        %v2485 = vunpack.c.l.b16 %v2466
        %v2486 = vunpack.c.l.b16 %v2467
        %v2487 = vunpack.c.l.b16 %v2468
        %v2488 = vunpack.c.l.b16 %v2469
        %v2489 = vpack.c.b16 %v2484, %v2483
        %v2490 = vpack.c.b16 %v2486, %v2485
        %v2491 = vpack.c.b16 %v2488, %v2487
        %vm2495 = vcmask 392192
        %v2497 = vsel %vm2495, %v2462, 0
        %v2500 = vsel %vm2495, %v2463, 0
        %2502 = vmatprep.subr.bf16.mxu0 0
        %2503 = vmatpush1.bf16.msra.mxu0 0
        %2504 = vmatprep.subr.bf16.mxu0 0
        %2505 = vmatpush1.bf16.msra.mxu0 0
        %2506 = vmatprep.subr.bf16.mxu0 0
        %2507 = vmatpush1.bf16.msra.mxu0 0
        %2508 = vmatprep.subr.bf16.mxu0 0
        %2509 = vmatpush1.bf16.msra.mxu0 0
        %2510 = vmatprep.subr.bf16.mxu0 0
        %2511 = vmatpush1.bf16.msra.mxu0 0
        %2512 = vmatprep.subr.bf16.mxu0 0
        %2513 = vmatpush1.bf16.msra.mxu0 %v2491
        %2514 = vmatprep.subr.bf16.mxu0 0
        %2515 = vmatpush1.bf16.msra.mxu0 %v2490
        %2516 = vmatprep.subr.bf16.mxu0 0
        %2517 = vmatpush1.bf16.msra.mxu0 %v2489
        %2518 = vmatprep.subr.bf16.mxu0 0
        %2519 = vmatpush2.bf16.msra.mxu0 0
        %2520 = vmatprep.subr.bf16.mxu0 0
        %2521 = vmatpush2.bf16.msra.mxu0 0
        %2522 = vmatprep.subr.bf16.mxu0 0
        %2523 = vmatpush2.bf16.msra.mxu0 0
        %2524 = vmatprep.subr.bf16.mxu0 0
        %2525 = vmatpush2.bf16.msra.mxu0 0
        %2526 = vmatprep.subr.bf16.mxu0 0
        %2527 = vmatpush2.bf16.msra.mxu0 0
        %2528 = vmatprep.subr.bf16.mxu0 0
        %2529 = vmatpush2.bf16.msra.mxu0 0
        %2530 = vmatprep.subr.bf16.mxu0 0
        %2531 = vmatpush2.bf16.msra.mxu0 0
        %2532 = vmatprep.subr.bf16.mxu0 0
        %2533 = vmatpush2.bf16.msra.mxu0 0
        %2534 = vmatprep.mubr.bf16.mxu0 0
        %2535 = vmatmul.mubr.bf16.gmra.mxu0 %v2497
        %v2536 = vpop.f32.mrf.mxu0
        %v2537 = vadd.f32 %v2475, %v2536
        %v2538 = vpop.f32.mrf.mxu0
        %v2539 = vpop.f32.mrf.mxu0
        %v2540 = vadd.f32 %v2475, %v2539
        %v2541 = vpop.f32.mrf.mxu0
        %2542 = vmatprep.mubr.bf16.mxu0 0
        %2543 = vmatmul.mubr.bf16.gmra.mxu0 %v2500
        %v2544 = vpop.f32.mrf.mxu0
        %v2545 = vadd.f32 %v2475, %v2544
        %v2546 = vpop.f32.mrf.mxu0
        %v2547 = vpop.f32.mrf.mxu0
        %v2548 = vadd.f32 %v2475, %v2547
        %v2549 = vpop.f32.mrf.mxu0
        %2550 = vdwg.mxu0
        %v2551 = vmax.f32 %v2537, 0.0
        %v2552 = vmax.f32 %v2540, 0.0
        %v2553 = vmax.f32 %v2545, 0.0
        %v2554 = vmax.f32 %v2548, 0.0
        %v2559 = vcombine.high %v2551, %v2551
        %v2561 = vunpack.c.l.s4 1966171168
        %v2562 = vunpack.c.0.s8 %v2561
        %v2563 = vlaneseq
        %v2564 = vshrl.u32 %v2563, 7
        %v2565 = vsub.s32 %v2562, %v2564
        %v2566 = vrot.slane %v2551, %v2565
        %v2568 = vunpack.c.l.s4 1966171168
        %v2569 = vunpack.c.0.s8 %v2568
        %v2570 = vlaneseq
        %v2571 = vshrl.u32 %v2570, 7
        %v2572 = vsub.s32 %v2569, %v2571
        %v2573 = vrot.slane %v2559, %v2572
        %v2574 = vcombine.high %v2566, %v2566
        %v2575 = vcombine.high %v2573, %v2573
        %v2577 = vunpack.c.l.s4 1966171168
        %v2578 = vunpack.c.0.s8 %v2577
        %v2579 = vlaneseq
        %v2580 = vshrl.u32 %v2579, 7
        %v2581 = vsub.s32 %v2578, %v2580
        %v2582 = vrot.slane %v2566, %v2581
        %v2584 = vunpack.c.l.s4 1966171168
        %v2585 = vunpack.c.0.s8 %v2584
        %v2586 = vlaneseq
        %v2587 = vshrl.u32 %v2586, 7
        %v2588 = vsub.s32 %v2585, %v2587
        %v2589 = vrot.slane %v2573, %v2588
        %v2591 = vunpack.c.l.s4 1966171168
        %v2592 = vunpack.c.0.s8 %v2591
        %v2593 = vlaneseq
        %v2594 = vshrl.u32 %v2593, 7
        %v2595 = vsub.s32 %v2592, %v2594
        %v2596 = vrot.slane %v2574, %v2595
        %v2598 = vunpack.c.l.s4 1966171168
        %v2599 = vunpack.c.0.s8 %v2598
        %v2600 = vlaneseq
        %v2601 = vshrl.u32 %v2600, 7
        %v2602 = vsub.s32 %v2599, %v2601
        %v2603 = vrot.slane %v2575, %v2602
        %v2604 = vcombine.high %v2582, %v2582
        %v2605 = vcombine.high %v2589, %v2589
        %v2606 = vcombine.high %v2596, %v2596
        %v2607 = vcombine.high %v2603, %v2603
        %v2608 = vcombine.high %v2552, %v2552
        %v2610 = vunpack.c.l.s4 1966171168
        %v2611 = vunpack.c.0.s8 %v2610
        %v2612 = vlaneseq
        %v2613 = vshrl.u32 %v2612, 7
        %v2614 = vsub.s32 %v2611, %v2613
        %v2615 = vrot.slane %v2552, %v2614
        %v2617 = vunpack.c.l.s4 1966171168
        %v2618 = vunpack.c.0.s8 %v2617
        %v2619 = vlaneseq
        %v2620 = vshrl.u32 %v2619, 7
        %v2621 = vsub.s32 %v2618, %v2620
        %v2622 = vrot.slane %v2608, %v2621
        %v2623 = vcombine.high %v2615, %v2615
        %v2624 = vcombine.high %v2622, %v2622
        %v2626 = vunpack.c.l.s4 1966171168
        %v2627 = vunpack.c.0.s8 %v2626
        %v2628 = vlaneseq
        %v2629 = vshrl.u32 %v2628, 7
        %v2630 = vsub.s32 %v2627, %v2629
        %v2631 = vrot.slane %v2615, %v2630
        %v2633 = vunpack.c.l.s4 1966171168
        %v2634 = vunpack.c.0.s8 %v2633
        %v2635 = vlaneseq
        %v2636 = vshrl.u32 %v2635, 7
        %v2637 = vsub.s32 %v2634, %v2636
        %v2638 = vrot.slane %v2622, %v2637
        %v2640 = vunpack.c.l.s4 1966171168
        %v2641 = vunpack.c.0.s8 %v2640
        %v2642 = vlaneseq
        %v2643 = vshrl.u32 %v2642, 7
        %v2644 = vsub.s32 %v2641, %v2643
        %v2645 = vrot.slane %v2623, %v2644
        %v2647 = vunpack.c.l.s4 1966171168
        %v2648 = vunpack.c.0.s8 %v2647
        %v2649 = vlaneseq
        %v2650 = vshrl.u32 %v2649, 7
        %v2651 = vsub.s32 %v2648, %v2650
        %v2652 = vrot.slane %v2624, %v2651
        %v2653 = vcombine.high %v2631, %v2631
        %v2654 = vcombine.high %v2638, %v2638
        %v2655 = vcombine.high %v2645, %v2645
        %v2656 = vcombine.high %v2652, %v2652
        %v2657 = vcombine.high %v2553, %v2553
        %v2659 = vunpack.c.l.s4 1966171168
        %v2660 = vunpack.c.0.s8 %v2659
        %v2661 = vlaneseq
        %v2662 = vshrl.u32 %v2661, 7
        %v2663 = vsub.s32 %v2660, %v2662
        %v2664 = vrot.slane %v2553, %v2663
        %v2666 = vunpack.c.l.s4 1966171168
        %v2667 = vunpack.c.0.s8 %v2666
        %v2668 = vlaneseq
        %v2669 = vshrl.u32 %v2668, 7
        %v2670 = vsub.s32 %v2667, %v2669
        %v2671 = vrot.slane %v2657, %v2670
        %v2672 = vcombine.high %v2664, %v2664
        %v2673 = vcombine.high %v2671, %v2671
        %v2675 = vunpack.c.l.s4 1966171168
        %v2676 = vunpack.c.0.s8 %v2675
        %v2677 = vlaneseq
        %v2678 = vshrl.u32 %v2677, 7
        %v2679 = vsub.s32 %v2676, %v2678
        %v2680 = vrot.slane %v2664, %v2679
        %v2682 = vunpack.c.l.s4 1966171168
        %v2683 = vunpack.c.0.s8 %v2682
        %v2684 = vlaneseq
        %v2685 = vshrl.u32 %v2684, 7
        %v2686 = vsub.s32 %v2683, %v2685
        %v2687 = vrot.slane %v2671, %v2686
        %v2689 = vunpack.c.l.s4 1966171168
        %v2690 = vunpack.c.0.s8 %v2689
        %v2691 = vlaneseq
        %v2692 = vshrl.u32 %v2691, 7
        %v2693 = vsub.s32 %v2690, %v2692
        %v2694 = vrot.slane %v2672, %v2693
        %v2696 = vunpack.c.l.s4 1966171168
        %v2697 = vunpack.c.0.s8 %v2696
        %v2698 = vlaneseq
        %v2699 = vshrl.u32 %v2698, 7
        %v2700 = vsub.s32 %v2697, %v2699
        %v2701 = vrot.slane %v2673, %v2700
        %v2702 = vcombine.high %v2680, %v2680
        %v2703 = vcombine.high %v2687, %v2687
        %v2704 = vcombine.high %v2694, %v2694
        %v2705 = vcombine.high %v2701, %v2701
        %v2707 = vunpack.c.l.s4 1966171168
        %v2708 = vunpack.c.0.s8 %v2707
        %v2709 = vlaneseq
        %v2710 = vshrl.u32 %v2709, 7
        %v2711 = vsub.s32 %v2708, %v2710
        %v2712 = vrot.slane %v2554, %v2711
        %v2713 = vcombine.high %v2712, %v2712
        %v2715 = vunpack.c.l.s4 1966171168
        %v2716 = vunpack.c.0.s8 %v2715
        %v2717 = vlaneseq
        %v2718 = vshrl.u32 %v2717, 7
        %v2719 = vsub.s32 %v2716, %v2718
        %v2720 = vrot.slane %v2712, %v2719
        %v2722 = vunpack.c.l.s4 1966171168
        %v2723 = vunpack.c.0.s8 %v2722
        %v2724 = vlaneseq
        %v2725 = vshrl.u32 %v2724, 7
        %v2726 = vsub.s32 %v2723, %v2725
        %v2727 = vrot.slane %v2713, %v2726
        %v2728 = vcombine.high %v2720, %v2720
        %v2729 = vcombine.high %v2727, %v2727
        %v2730 = vcombine.low %v2582, %v2596
        %v2731 = vcombine.low %v2604, %v2606
        %v2732 = vcombine.low %v2589, %v2603
        %v2734 = vunpack.c.l.s4 1966171168
        %v2735 = vunpack.c.0.s8 %v2734
        %v2736 = vlaneseq
        %v2737 = vshrl.u32 %v2736, 7
        %v2738 = vsub.s32 %v2735, %v2737
        %v2739 = vrot.slane %v2730, %v2738
        %v2741 = vunpack.c.l.s4 1966171168
        %v2742 = vunpack.c.0.s8 %v2741
        %v2743 = vlaneseq
        %v2744 = vshrl.u32 %v2743, 7
        %v2745 = vsub.s32 %v2742, %v2744
        %v2746 = vrot.slane %v2731, %v2745
        %v2748 = vunpack.c.l.s4 1966171168
        %v2749 = vunpack.c.0.s8 %v2748
        %v2750 = vlaneseq
        %v2751 = vshrl.u32 %v2750, 7
        %v2752 = vsub.s32 %v2749, %v2751
        %v2753 = vrot.slane %v2732, %v2752
        %v2755 = vunpack.c.l.s4 1966171168
        %v2756 = vunpack.c.0.s8 %v2755
        %v2757 = vlaneseq
        %v2758 = vshrl.u32 %v2757, 7
        %v2759 = vsub.s32 %v2756, %v2758
        %v2760 = vrot.slane %v2605, %v2759
        %v2761 = vcombine.low %v2739, %v2746
        %v2762 = vcombine.low %v2753, %v2760
        %v2764 = vunpack.c.l.s4 1966171168
        %v2765 = vunpack.c.0.s8 %v2764
        %v2766 = vlaneseq
        %v2767 = vshrl.u32 %v2766, 7
        %v2768 = vsub.s32 %v2765, %v2767
        %v2769 = vrot.slane %v2761, %v2768
        %v2771 = vunpack.c.l.s4 1966171168
        %v2772 = vunpack.c.0.s8 %v2771
        %v2773 = vlaneseq
        %v2774 = vshrl.u32 %v2773, 7
        %v2775 = vsub.s32 %v2772, %v2774
        %v2776 = vrot.slane %v2762, %v2775
        %v2777 = vcombine.low %v2769, %v2776
        %v2778 = vcombine.low %v2607, %v2631
        %v2779 = vcombine.low %v2645, %v2653
        %v2780 = vcombine.low %v2655, %v2638
        %v2782 = vunpack.c.l.s4 1966171168
        %v2783 = vunpack.c.0.s8 %v2782
        %v2784 = vlaneseq
        %v2785 = vshrl.u32 %v2784, 7
        %v2786 = vsub.s32 %v2783, %v2785
        %v2787 = vrot.slane %v2778, %v2786
        %v2789 = vunpack.c.l.s4 1966171168
        %v2790 = vunpack.c.0.s8 %v2789
        %v2791 = vlaneseq
        %v2792 = vshrl.u32 %v2791, 7
        %v2793 = vsub.s32 %v2790, %v2792
        %v2794 = vrot.slane %v2779, %v2793
        %v2796 = vunpack.c.l.s4 1966171168
        %v2797 = vunpack.c.0.s8 %v2796
        %v2798 = vlaneseq
        %v2799 = vshrl.u32 %v2798, 7
        %v2800 = vsub.s32 %v2797, %v2799
        %v2801 = vrot.slane %v2780, %v2800
        %v2803 = vunpack.c.l.s4 1966171168
        %v2804 = vunpack.c.0.s8 %v2803
        %v2805 = vlaneseq
        %v2806 = vshrl.u32 %v2805, 7
        %v2807 = vsub.s32 %v2804, %v2806
        %v2808 = vrot.slane %v2652, %v2807
        %v2809 = vcombine.low %v2787, %v2794
        %v2810 = vcombine.low %v2801, %v2808
        %v2812 = vunpack.c.l.s4 1966171168
        %v2813 = vunpack.c.0.s8 %v2812
        %v2814 = vlaneseq
        %v2815 = vshrl.u32 %v2814, 7
        %v2816 = vsub.s32 %v2813, %v2815
        %v2817 = vrot.slane %v2809, %v2816
        %v2819 = vunpack.c.l.s4 1966171168
        %v2820 = vunpack.c.0.s8 %v2819
        %v2821 = vlaneseq
        %v2822 = vshrl.u32 %v2821, 7
        %v2823 = vsub.s32 %v2820, %v2822
        %v2824 = vrot.slane %v2810, %v2823
        %v2825 = vcombine.low %v2817, %v2824
        %v2826 = vcombine.low %v2654, %v2656
        %v2827 = vcombine.low %v2680, %v2694
        %v2828 = vcombine.low %v2702, %v2704
        %v2830 = vunpack.c.l.s4 1966171168
        %v2831 = vunpack.c.0.s8 %v2830
        %v2832 = vlaneseq
        %v2833 = vshrl.u32 %v2832, 7
        %v2834 = vsub.s32 %v2831, %v2833
        %v2835 = vrot.slane %v2826, %v2834
        %v2837 = vunpack.c.l.s4 1966171168
        %v2838 = vunpack.c.0.s8 %v2837
        %v2839 = vlaneseq
        %v2840 = vshrl.u32 %v2839, 7
        %v2841 = vsub.s32 %v2838, %v2840
        %v2842 = vrot.slane %v2827, %v2841
        %v2844 = vunpack.c.l.s4 1966171168
        %v2845 = vunpack.c.0.s8 %v2844
        %v2846 = vlaneseq
        %v2847 = vshrl.u32 %v2846, 7
        %v2848 = vsub.s32 %v2845, %v2847
        %v2849 = vrot.slane %v2828, %v2848
        %v2851 = vunpack.c.l.s4 1966171168
        %v2852 = vunpack.c.0.s8 %v2851
        %v2853 = vlaneseq
        %v2854 = vshrl.u32 %v2853, 7
        %v2855 = vsub.s32 %v2852, %v2854
        %v2856 = vrot.slane %v2687, %v2855
        %v2857 = vcombine.low %v2835, %v2842
        %v2858 = vcombine.low %v2849, %v2856
        %v2860 = vunpack.c.l.s4 1966171168
        %v2861 = vunpack.c.0.s8 %v2860
        %v2862 = vlaneseq
        %v2863 = vshrl.u32 %v2862, 7
        %v2864 = vsub.s32 %v2861, %v2863
        %v2865 = vrot.slane %v2857, %v2864
        %v2867 = vunpack.c.l.s4 1966171168
        %v2868 = vunpack.c.0.s8 %v2867
        %v2869 = vlaneseq
        %v2870 = vshrl.u32 %v2869, 7
        %v2871 = vsub.s32 %v2868, %v2870
        %v2872 = vrot.slane %v2858, %v2871
        %v2873 = vcombine.low %v2865, %v2872
        %v2874 = vcombine.low %v2701, %v2703
        %v2875 = vcombine.low %v2705, %v2720
        %v2876 = vcombine.low %v2727, %v2728
        %v2878 = vunpack.c.l.s4 1966171168
        %v2879 = vunpack.c.0.s8 %v2878
        %v2880 = vlaneseq
        %v2881 = vshrl.u32 %v2880, 7
        %v2882 = vsub.s32 %v2879, %v2881
        %v2883 = vrot.slane %v2874, %v2882
        %v2885 = vunpack.c.l.s4 1966171168
        %v2886 = vunpack.c.0.s8 %v2885
        %v2887 = vlaneseq
        %v2888 = vshrl.u32 %v2887, 7
        %v2889 = vsub.s32 %v2886, %v2888
        %v2890 = vrot.slane %v2875, %v2889
        %v2892 = vunpack.c.l.s4 1966171168
        %v2893 = vunpack.c.0.s8 %v2892
        %v2894 = vlaneseq
        %v2895 = vshrl.u32 %v2894, 7
        %v2896 = vsub.s32 %v2893, %v2895
        %v2897 = vrot.slane %v2876, %v2896
        %v2899 = vunpack.c.l.s4 1966171168
        %v2900 = vunpack.c.0.s8 %v2899
        %v2901 = vlaneseq
        %v2902 = vshrl.u32 %v2901, 7
        %v2903 = vsub.s32 %v2900, %v2902
        %v2904 = vrot.slane %v2729, %v2903
        %v2905 = vcombine.low %v2883, %v2890
        %v2906 = vcombine.low %v2897, %v2904
        %v2908 = vunpack.c.l.s4 1966171168
        %v2909 = vunpack.c.0.s8 %v2908
        %v2910 = vlaneseq
        %v2911 = vshrl.u32 %v2910, 7
        %v2912 = vsub.s32 %v2909, %v2911
        %v2913 = vrot.slane %v2905, %v2912
        %v2915 = vunpack.c.l.s4 1966171168
        %v2916 = vunpack.c.0.s8 %v2915
        %v2917 = vlaneseq
        %v2918 = vshrl.u32 %v2917, 7
        %v2919 = vsub.s32 %v2916, %v2918
        %v2920 = vrot.slane %v2906, %v2919
        %v2921 = vcombine.low %v2913, %v2920
        %vm2926 = vcmask 260096
        %2927 = vst.msk [vmem:[%s293] sm:$0x7f] %vm2926, %v2777
        %2928 = vst.msk [vmem:[%s293 + $0x8] sm:$0x7f] %vm2926, %v2825
        %2929 = vst.msk [vmem:[%s293 + $0x10] sm:$0x7f] %vm2926, %v2873
        %2930 = vst.msk [vmem:[%s293 + $0x18] sm:$0x7f] %vm2926, %v2921
        %s2931 = smul.u32 4, %s19
        %p2932 = scmp.lt.s32.totalorder %s2931, 7
        %s2933 = scalar_select %p2932, %s2931, 7
        %s2934 = smul.addr %s2933, 8
        %s2935 = scalar_lea.vmem %s7, %s2934
        // Predicated region
        $region53: #{tpu_custom_call.1} parent=47 // pred_check
          %p2936 = pneg %p189
        $region54: #{tpu_custom_call.1} parent=47 // pred_check_branch
          %2938 = sbr.rel (%p2936) target = $region56
        $region55: #{tpu_custom_call.1} parent=47 // pred_region
          %s2939 = smul.u32 4, %s19
        $region56: #{tpu_custom_call.1} parent=47 // pred_fallthru
          _
      $region48: #{tpu_custom_call.1} parent=5 // pred_fallthru
        _
      %p2940 = scmp.le.s32.totalorder 2, %s14
      // Predicated region
      $region57: #{tpu_custom_call.1} parent=5 // pred_check
        %p2941 = pneg %p2940
      $region58: #{tpu_custom_call.1} parent=5 // pred_check_branch
        %2943 = sbr.rel (%p2941) target = $region60
      $region59: #{tpu_custom_call.1} parent=5 // pred_region
        %s2944 = ssub.s32 %s14, 2
        // Predicated region
        $region61: #{tpu_custom_call.1} parent=59 // pred_check
          %p2945 = pneg %p195
        $region62: #{tpu_custom_call.1} parent=59 // pred_check_branch
          %2947 = sbr.rel (%p2945) target = $region64
        $region63: #{tpu_custom_call.1} parent=59 // pred_region
          %s2948 = smul.u32 4, %s20
          %p2949 = scmp.lt.s32.totalorder %s2948, 7
          %s2950 = scalar_select %p2949, %s2948, 7
          %s2951 = smul.addr %s2950, 8
          %s2952 = scalar_lea.vmem %s7, %s2951
        $region64: #{tpu_custom_call.1} parent=59 // pred_fallthru
          _
      $region60: #{tpu_custom_call.1} parent=5 // pred_fallthru
        _
    $region6: #{tpu_custom_call.1} parent=1 // loop_footer
      %s18 = sadd.s32 1, %s14
    $region7: #{tpu_custom_call.1} parent=1 // loop_footer_branch
      %13 = sbr.rel target = $region3
    $region8: #{tpu_custom_call.1} parent=1 // loop_exit
      _
    %2953 = vsyncpa [#allocation3], 1
    %s2954 = scalar_lea.sflag [#allocation3], 1
    %2955 = vsyncpa %s2954, 1

</llo_original>
